<compile_context>
chip_gen: v7x
topology: tpu7x:2x2x1
jax: 0.10.0
libtpu: 0.0.40
codegen_flags: <defaults>
</compile_context>

<pallas_src>
import functools
import math

import jax
import jax.numpy as jnp
from jax import lax
from jax.experimental import pallas as pl
from jax.experimental.pallas import tpu as pltpu

LN_EPS = 1e-5
_INV_SQRT2 = 1.0 / math.sqrt(2.0)


def _round_up(x, m):
    return (x + m - 1) // m * m


def _rnn_block_kernel(zx_ref, init_ref, wh_ref, ln_w_ref, ln_b_ref,
                      o_ref, state_ref, *, t_blk, osize):
    """One grid step = one (batch-block, time-block) of T_BLK recurrent steps.

    zx_ref:   (T_BLK, B_BLK, O_PAD)  precomputed x_t @ W_x, f32
    init_ref: (1, O_PAD)             learnable initial state
    wh_ref:   (O_PAD, O_PAD)         recurrent weight (in, out)
    o_ref:    (T_BLK, B_BLK, O_PAD)  output states
    state_ref:(B_BLK, O_PAD) f32     carried hidden state (VMEM scratch)
    """
    t_block = pl.program_id(1)

    # Re-initialize the carried state from init_state at the first time block
    # of every batch block (time is the innermost grid axis, so this fires
    # once per batch block and no stale state leaks across batch blocks).
    @pl.when(t_block == 0)
    def _():
        state_ref[...] = jnp.broadcast_to(
            init_ref[...].astype(jnp.float32), state_ref.shape)

    b_blk, o_pad = state_ref.shape
    inv_osize = 1.0 / float(osize)

    # Loop-invariant values hoisted out of the unrolled time loop
    # (JAX does not CSE broadcast_in_dim).
    wh = wh_ref[...]
    ln_w = jnp.broadcast_to(ln_w_ref[...].astype(jnp.float32), (b_blk, o_pad))
    ln_b = jnp.broadcast_to(ln_b_ref[...].astype(jnp.float32), (b_blk, o_pad))
    if osize != o_pad:
        lane = lax.broadcasted_iota(jnp.int32, (1, o_pad), 1)
        pad_mask = jnp.broadcast_to((lane < osize).astype(jnp.float32),
                                    (b_blk, o_pad))
    else:
        pad_mask = None

    def step(t, state):
        # z_t = (x_t @ W_x)  [streamed in, precomputed]  +  state_{t-1} @ W_h
        z = zx_ref[t].astype(jnp.float32)
        z = z + jnp.dot(state.astype(wh.dtype), wh,
                        preferred_element_type=jnp.float32)

        # LayerNorm(osize) in f32.  Padded lanes of z are exactly zero (weights
        # and z_x are zero-padded), so only the variance needs masking (the
        # centered values are -mu on padded lanes).
        mu = jnp.sum(z, axis=-1, keepdims=True) * inv_osize
        zc = z - mu
        zc_v = zc if pad_mask is None else zc * pad_mask
        var = jnp.sum(zc_v * zc_v, axis=-1, keepdims=True) * inv_osize
        normed = zc * lax.rsqrt(var + LN_EPS) * ln_w + ln_b

        # Exact (erf) GELU — matches torch.nn.GELU() default.
        g = 0.5 * normed * (1.0 + lax.erf(normed * _INV_SQRT2))

        # TODO(synk): nn.Dropout(0.1) is identity in eval mode; training-mode
        # dropout would use pltpu.prng_seed + pltpu.stateful_bernoulli here.
        o_ref[t] = g.astype(o_ref.dtype)
        return g

    state_ref[...] = lax.fori_loop(0, t_blk, step, state_ref[...],
                                   unroll=True)


@functools.partial(jax.jit, static_argnames=("t_blk",))
def rnn_layer_forward(x, init_state, wx, wh, ln_w, ln_b, *, t_blk=8):
    """x: (B, S, isize). init_state: (1, osize).
    wx: (isize, osize) / wh: (osize, osize) — the transposed (in, out) halves
    of the PyTorch Linear weight (osize, isize+osize). Returns (B, S, osize)."""
    B, S, isize = x.shape
    osize = wh.shape[0]
    out_dtype = x.dtype

    # ---- Hoist the non-recurrent projection out of the recurrence ----------
    # One large (S*B, isize) @ (isize, osize) matmul with real MXU utilization;
    # the serial per-step critical path is then a single W_h matmul + LN/GELU.
    z_x = jnp.einsum("bsi,io->sbo", x, wx,
                     preferred_element_type=jnp.float32)     # (S, B, osize) f32

    # ---- Pad to lane/sublane-dense tiles: B -> x8, osize -> x128 ------------
    o_pad = _round_up(osize, 128)
    b_pad = _round_up(B, 8)
    b_blk = b_pad if b_pad <= 128 else 128
    b_pad = _round_up(b_pad, b_blk)
    t_blk = max(1, min(int(t_blk), S))
    s_pad = _round_up(S, t_blk)

    z_x_p = jnp.pad(z_x, ((0, s_pad - S), (0, b_pad - B), (0, o_pad - osize)))
    wh_p = jnp.pad(wh, ((0, o_pad - osize), (0, o_pad - osize)))
    init_p = jnp.pad(init_state.astype(jnp.float32),
                     ((0, 0), (0, o_pad - osize)))
    ln_w_p = jnp.pad(ln_w.reshape(1, osize).astype(jnp.float32),
                     ((0, 0), (0, o_pad - osize)))
    ln_b_p = jnp.pad(ln_b.reshape(1, osize).astype(jnp.float32),
                     ((0, 0), (0, o_pad - osize)))

    n_b = b_pad // b_blk
    n_t = s_pad // t_blk

    # ---- VMEM budget: actual block footprint (+ headroom), capped at 48 MiB
    # so it stays well under v7x's 64 MiB physical VMEM per TensorCore. -------
    out_isize = jnp.dtype(out_dtype).itemsize
    wh_isize = jnp.dtype(wh_p.dtype).itemsize
    blk_elems = t_blk * b_blk * o_pad
    vmem_needed = (
        2 * blk_elems * 4                 # streamed z_x block (double buffer)
        + 2 * blk_elems * out_isize       # output block (double buffer)
        + 2 * o_pad * o_pad * wh_isize    # W_h (constant index map)
        + 2 * 3 * o_pad * 4               # init_state, ln_w, ln_b
        + b_blk * o_pad * 4)              # carried state scratch
    vmem_limit = int(min(max(2 * vmem_needed + (4 << 20), 32 << 20), 48 << 20))

    flops = int(2 * s_pad * b_pad * o_pad * o_pad + 10 * s_pad * b_pad * o_pad)
    bytes_accessed = int(
        s_pad * b_pad * o_pad * (4 + out_isize)      # z_x in + states out
        + o_pad * o_pad * wh_isize                   # W_h
        + 3 * o_pad * 4)                             # init / LN params

    kernel = functools.partial(_rnn_block_kernel, t_blk=t_blk, osize=osize)

    out_sbo = pl.pallas_call(
        kernel,
        out_shape=jax.ShapeDtypeStruct((s_pad, b_pad, o_pad), out_dtype),
        grid_spec=pltpu.PrefetchScalarGridSpec(
            num_scalar_prefetch=0,
            grid=(n_b, n_t),                     # (batch blocks, time blocks)
            in_specs=[
                pl.BlockSpec((t_blk, b_blk, o_pad), lambda b, t: (t, b, 0)),  # z_x
                pl.BlockSpec((1, o_pad), lambda b, t: (0, 0)),                # init
                pl.BlockSpec((o_pad, o_pad), lambda b, t: (0, 0)),            # W_h
                pl.BlockSpec((1, o_pad), lambda b, t: (0, 0)),                # LN w
                pl.BlockSpec((1, o_pad), lambda b, t: (0, 0)),                # LN b
            ],
            out_specs=pl.BlockSpec((t_blk, b_blk, o_pad), lambda b, t: (t, b, 0)),
            scratch_shapes=[pltpu.VMEM((b_blk, o_pad), jnp.float32)],  # state
        ),
        compiler_params=pltpu.CompilerParams(
            # Independent batch recurrences shard across TensorCores (v7x
            # megacore); the time axis is a true recurrence -> arbitrary.
            dimension_semantics=("parallel", "arbitrary"),
            vmem_limit_bytes=vmem_limit,
        ),
        cost_estimate=pl.CostEstimate(
            flops=flops,
            transcendentals=int(s_pad * b_pad * o_pad),
            bytes_accessed=bytes_accessed),
    )(z_x_p, init_p, wh_p, ln_w_p, ln_b_p)

    out = out_sbo[:S, :B, :osize]                 # strip padding
    return jnp.swapaxes(out, 0, 1)                # back to (B, S, osize)


def _reference(x, init_state, wx, wh, ln_w, ln_b):
    B = x.shape[0]
    osize = wh.shape[0]
    state0 = jnp.broadcast_to(init_state.astype(jnp.float32), (B, osize))

    def step(state, x_t):
        z = x_t.astype(jnp.float32) @ wx + state @ wh
        mu = jnp.mean(z, axis=-1, keepdims=True)
        var = jnp.mean((z - mu) ** 2, axis=-1, keepdims=True)
        normed = (z - mu) * jax.lax.rsqrt(var + LN_EPS) * ln_w + ln_b
        g = jax.nn.gelu(normed, approximate=False)
        return g, g

    xs = jnp.swapaxes(x, 0, 1)            # (S, B, isize)
    _, ys = jax.lax.scan(step, state0, xs)
    return jnp.swapaxes(ys, 0, 1).astype(x.dtype)


if __name__ == "__main__":
    key = jax.random.PRNGKey(0)
    B, S, isize = 2, 8, 32
    osize = isize                          # osize=None default -> osize = isize

    k_x, k_wx, k_wh, k_init = jax.random.split(key, 4)

    x = jax.random.normal(k_x, (B, S, isize), dtype=jnp.float32)

    # Deterministic Linear-like init; weights stored transposed as (in, out).
    bound = 1.0 / math.sqrt(isize + osize)
    wx = jax.random.uniform(k_wx, (isize, osize), jnp.float32, -bound, bound)
    wh = jax.random.uniform(k_wh, (osize, osize), jnp.float32, -bound, bound)
    # init_state is a zeros Parameter in PyTorch; use small random values here
    # so the state-initialization path is actually exercised.
    init_state = 0.1 * jax.random.normal(k_init, (1, osize), dtype=jnp.float32)
    ln_w = jnp.ones((osize,), jnp.float32)    # LayerNorm default affine init
    ln_b = jnp.zeros((osize,), jnp.float32)

    out = rnn_layer_forward(x, init_state, wx, wh, ln_w, ln_b)
    out = jax.block_until_ready(out)

    ref = _reference(x, init_state, wx, wh, ln_w, ln_b)
    assert out.shape == (B, S, osize)
    assert jnp.allclose(out, ref, atol=1e-4, rtol=1e-4), "mismatch vs reference"

    print("KERNEL_OK")
</pallas_src>

<mosaic_0001>
module attributes {stable_mosaic.version = 11 : i64} {
  func.func @_rnn_block_kernel(%arg0: i32, %arg1: i32, %arg2: memref<8x8x128xf32, #tpu.memory_space<vmem>>, %arg3: memref<1x128xf32, #tpu.memory_space<vmem>>, %arg4: memref<128x128xf32, #tpu.memory_space<vmem>>, %arg5: memref<1x128xf32, #tpu.memory_space<vmem>>, %arg6: memref<1x128xf32, #tpu.memory_space<vmem>>, %arg7: memref<8x8x128xf32, #tpu.memory_space<vmem>>, %arg8: memref<8x128xf32, #tpu.memory_space<vmem>>) attributes {dimension_semantics = [#tpu.dimension_semantics<parallel>, #tpu.dimension_semantics<arbitrary>], iteration_bounds = array<i64: 1, 1>, scalar_prefetch = 0 : i64, scratch_operands = 1 : i64, tpu.core_type = #tpu.core_type<tc>, window_params = [{transform_indices = @transform_0, window_bounds = array<i64: 8, 8, 128>}, {pipeline_mode = #tpu.pipeline_mode<synchronous>, transform_indices = @transform_1, window_bounds = array<i64: 1, 128>}, {pipeline_mode = #tpu.pipeline_mode<synchronous>, transform_indices = @transform_2, window_bounds = array<i64: 128, 128>}, {pipeline_mode = #tpu.pipeline_mode<synchronous>, transform_indices = @transform_3, window_bounds = array<i64: 1, 128>}, {pipeline_mode = #tpu.pipeline_mode<synchronous>, transform_indices = @transform_4, window_bounds = array<i64: 1, 128>}, {transform_indices = @transform_5, window_bounds = array<i64: 8, 8, 128>}]} {
    %c0_i32 = arith.constant 0 : i32
    %0 = arith.cmpi eq, %arg1, %c0_i32 : i32
    %1 = arith.extui %0 : i1 to i32
    %c0_i32_0 = arith.constant 0 : i32
    %2 = arith.cmpi ne, %1, %c0_i32_0 : i32
    scf.if %2 {
      %c0_114 = arith.constant 0 : index
      %c0_115 = arith.constant 0 : index
      %307 = vector.load %arg3[%c0_114, %c0_115] : memref<1x128xf32, #tpu.memory_space<vmem>>, vector<1x128xf32>
      %308 = vector.shape_cast %307 : vector<1x128xf32> to vector<1x128xf32>
      %309 = vector.broadcast %308 : vector<1x128xf32> to vector<8x128xf32>
      %c0_116 = arith.constant 0 : index
      %c0_117 = arith.constant 0 : index
      %310 = vector.load %arg8[%c0_116, %c0_117] : memref<8x128xf32, #tpu.memory_space<vmem>>, vector<8x128xf32>
      tpu.vector_store %arg8[%c0_116, %c0_117], %309 {strides = array<i32>} : memref<8x128xf32, #tpu.memory_space<vmem>>, vector<8x128xf32>,
    } else {
    }
    %c0 = arith.constant 0 : index
    %c0_1 = arith.constant 0 : index
    %3 = vector.load %arg4[%c0, %c0_1] : memref<128x128xf32, #tpu.memory_space<vmem>>, vector<128x128xf32>
    %c0_2 = arith.constant 0 : index
    %c0_3 = arith.constant 0 : index
    %4 = vector.load %arg5[%c0_2, %c0_3] : memref<1x128xf32, #tpu.memory_space<vmem>>, vector<1x128xf32>
    %5 = vector.shape_cast %4 : vector<1x128xf32> to vector<1x128xf32>
    %6 = vector.broadcast %5 : vector<1x128xf32> to vector<8x128xf32>
    %c0_4 = arith.constant 0 : index
    %c0_5 = arith.constant 0 : index
    %7 = vector.load %arg6[%c0_4, %c0_5] : memref<1x128xf32, #tpu.memory_space<vmem>>, vector<1x128xf32>
    %8 = vector.shape_cast %7 : vector<1x128xf32> to vector<1x128xf32>
    %9 = vector.broadcast %8 : vector<1x128xf32> to vector<8x128xf32>
    %10 = tpu.iota {dimensions = array<i32: 1>} : vector<1x128xi32>
    %c32_i32 = arith.constant 32 : i32
    %11 = vector.broadcast %c32_i32 : i32 to vector<1x128xi32>
    %12 = arith.cmpi slt, %10, %11 : vector<1x128xi32>
    %13 = arith.extui %12 : vector<1x128xi1> to vector<1x128xi32>
    %14 = arith.sitofp %13 : vector<1x128xi32> to vector<1x128xf32>
    %15 = vector.shape_cast %14 : vector<1x128xf32> to vector<1x128xf32>
    %16 = vector.broadcast %15 : vector<1x128xf32> to vector<8x128xf32>
    %c0_6 = arith.constant 0 : index
    %c0_7 = arith.constant 0 : index
    %17 = vector.load %arg8[%c0_6, %c0_7] : memref<8x128xf32, #tpu.memory_space<vmem>>, vector<8x128xf32>
    %c0_i32_8 = arith.constant 0 : i32
    %18 = arith.index_cast %c0_i32_8 : i32 to index
    %c0_9 = arith.constant 0 : index
    %c0_10 = arith.constant 0 : index
    %19 = vector.load %arg2[%18, %c0_9, %c0_10] : memref<8x8x128xf32, #tpu.memory_space<vmem>>, vector<1x8x128xf32>
    %20 = vector.shape_cast %19 : vector<1x8x128xf32> to vector<8x128xf32>
    %cst = arith.constant dense<0.000000e+00> : vector<8x128xf32>
    %21 = tpu.matmul %17, %3, %cst {dimension_numbers = #tpu.dot_dimension_numbers<[1], [0], [0], [1], [0, 0, 1, 1], [], []>} : vector<8x128xf32>, vector<128x128xf32>, vector<8x128xf32> -> vector<8x128xf32>
    %22 = arith.addf %20, %21 : vector<8x128xf32>
    %cst_11 = arith.constant dense<0.000000e+00> : vector<8xf32>
    %23 = vector.multi_reduction <add>, %22, %cst_11 [1] : vector<8x128xf32> to vector<8xf32>
    %24 = vector.shape_cast %23 : vector<8xf32> to vector<8x1xf32>
    %cst_12 = arith.constant 3.125000e-02 : f32
    %25 = vector.broadcast %cst_12 : f32 to vector<8x1xf32>
    %26 = arith.mulf %24, %25 : vector<8x1xf32>
    %27 = vector.broadcast %26 : vector<8x1xf32> to vector<8x128xf32>
    %28 = arith.subf %22, %27 : vector<8x128xf32>
    %29 = arith.mulf %28, %16 : vector<8x128xf32>
    %30 = arith.mulf %29, %29 : vector<8x128xf32>
    %cst_13 = arith.constant dense<0.000000e+00> : vector<8xf32>
    %31 = vector.multi_reduction <add>, %30, %cst_13 [1] : vector<8x128xf32> to vector<8xf32>
    %32 = vector.shape_cast %31 : vector<8xf32> to vector<8x1xf32>
    %cst_14 = arith.constant 3.125000e-02 : f32
    %33 = vector.broadcast %cst_14 : f32 to vector<8x1xf32>
    %34 = arith.mulf %32, %33 : vector<8x1xf32>
    %cst_15 = arith.constant 9.99999974E-6 : f32
    %35 = vector.broadcast %cst_15 : f32 to vector<8x1xf32>
    %36 = arith.addf %34, %35 : vector<8x1xf32>
    %37 = math.rsqrt %36 : vector<8x1xf32>
    %38 = vector.broadcast %37 : vector<8x1xf32> to vector<8x128xf32>
    %39 = arith.mulf %28, %38 : vector<8x128xf32>
    %40 = arith.mulf %39, %6 : vector<8x128xf32>
    %41 = arith.addf %40, %9 : vector<8x128xf32>
    %cst_16 = arith.constant 5.000000e-01 : f32
    %42 = vector.broadcast %cst_16 : f32 to vector<8x128xf32>
    %43 = arith.mulf %42, %41 : vector<8x128xf32>
    %cst_17 = arith.constant 0.707106769 : f32
    %44 = vector.broadcast %cst_17 : f32 to vector<8x128xf32>
    %45 = arith.mulf %41, %44 : vector<8x128xf32>
    %46 = math.erf %45 : vector<8x128xf32>
    %cst_18 = arith.constant 1.000000e+00 : f32
    %47 = vector.broadcast %cst_18 : f32 to vector<8x128xf32>
    %48 = arith.addf %47, %46 : vector<8x128xf32>
    %49 = arith.mulf %43, %48 : vector<8x128xf32>
    %50 = arith.index_cast %c0_i32_8 : i32 to index
    %c0_19 = arith.constant 0 : index
    %c0_20 = arith.constant 0 : index
    %51 = vector.load %arg7[%50, %c0_19, %c0_20] : memref<8x8x128xf32, #tpu.memory_space<vmem>>, vector<1x8x128xf32>
    %52 = vector.shape_cast %51 : vector<1x8x128xf32> to vector<8x128xf32>
    %53 = vector.shape_cast %49 : vector<8x128xf32> to vector<1x8x128xf32>
    tpu.vector_store %arg7[%50, %c0_19, %c0_20], %53 {strides = array<i32>} : memref<8x8x128xf32, #tpu.memory_space<vmem>>, vector<1x8x128xf32>,
    %c1_i32 = arith.constant 1 : i32
    %54 = arith.index_cast %c1_i32 : i32 to index
    %c0_21 = arith.constant 0 : index
    %c0_22 = arith.constant 0 : index
    %55 = vector.load %arg2[%54, %c0_21, %c0_22] : memref<8x8x128xf32, #tpu.memory_space<vmem>>, vector<1x8x128xf32>
    %56 = vector.shape_cast %55 : vector<1x8x128xf32> to vector<8x128xf32>
    %cst_23 = arith.constant dense<0.000000e+00> : vector<8x128xf32>
    %57 = tpu.matmul %49, %3, %cst_23 {dimension_numbers = #tpu.dot_dimension_numbers<[1], [0], [0], [1], [0, 0, 1, 1], [], []>} : vector<8x128xf32>, vector<128x128xf32>, vector<8x128xf32> -> vector<8x128xf32>
    %58 = arith.addf %56, %57 : vector<8x128xf32>
    %cst_24 = arith.constant dense<0.000000e+00> : vector<8xf32>
    %59 = vector.multi_reduction <add>, %58, %cst_24 [1] : vector<8x128xf32> to vector<8xf32>
    %60 = vector.shape_cast %59 : vector<8xf32> to vector<8x1xf32>
    %cst_25 = arith.constant 3.125000e-02 : f32
    %61 = vector.broadcast %cst_25 : f32 to vector<8x1xf32>
    %62 = arith.mulf %60, %61 : vector<8x1xf32>
    %63 = vector.broadcast %62 : vector<8x1xf32> to vector<8x128xf32>
    %64 = arith.subf %58, %63 : vector<8x128xf32>
    %65 = arith.mulf %64, %16 : vector<8x128xf32>
    %66 = arith.mulf %65, %65 : vector<8x128xf32>
    %cst_26 = arith.constant dense<0.000000e+00> : vector<8xf32>
    %67 = vector.multi_reduction <add>, %66, %cst_26 [1] : vector<8x128xf32> to vector<8xf32>
    %68 = vector.shape_cast %67 : vector<8xf32> to vector<8x1xf32>
    %cst_27 = arith.constant 3.125000e-02 : f32
    %69 = vector.broadcast %cst_27 : f32 to vector<8x1xf32>
    %70 = arith.mulf %68, %69 : vector<8x1xf32>
    %cst_28 = arith.constant 9.99999974E-6 : f32
    %71 = vector.broadcast %cst_28 : f32 to vector<8x1xf32>
    %72 = arith.addf %70, %71 : vector<8x1xf32>
    %73 = math.rsqrt %72 : vector<8x1xf32>
    %74 = vector.broadcast %73 : vector<8x1xf32> to vector<8x128xf32>
    %75 = arith.mulf %64, %74 : vector<8x128xf32>
    %76 = arith.mulf %75, %6 : vector<8x128xf32>
    %77 = arith.addf %76, %9 : vector<8x128xf32>
    %cst_29 = arith.constant 5.000000e-01 : f32
    %78 = vector.broadcast %cst_29 : f32 to vector<8x128xf32>
    %79 = arith.mulf %78, %77 : vector<8x128xf32>
    %cst_30 = arith.constant 0.707106769 : f32
    %80 = vector.broadcast %cst_30 : f32 to vector<8x128xf32>
    %81 = arith.mulf %77, %80 : vector<8x128xf32>
    %82 = math.erf %81 : vector<8x128xf32>
    %cst_31 = arith.constant 1.000000e+00 : f32
    %83 = vector.broadcast %cst_31 : f32 to vector<8x128xf32>
    %84 = arith.addf %83, %82 : vector<8x128xf32>
    %85 = arith.mulf %79, %84 : vector<8x128xf32>
    %86 = arith.index_cast %c1_i32 : i32 to index
    %c0_32 = arith.constant 0 : index
    %c0_33 = arith.constant 0 : index
    %87 = vector.load %arg7[%86, %c0_32, %c0_33] : memref<8x8x128xf32, #tpu.memory_space<vmem>>, vector<1x8x128xf32>
    %88 = vector.shape_cast %87 : vector<1x8x128xf32> to vector<8x128xf32>
    %89 = vector.shape_cast %85 : vector<8x128xf32> to vector<1x8x128xf32>
    tpu.vector_store %arg7[%86, %c0_32, %c0_33], %89 {strides = array<i32>} : memref<8x8x128xf32, #tpu.memory_space<vmem>>, vector<1x8x128xf32>,
    %c2_i32 = arith.constant 2 : i32
    %90 = arith.index_cast %c2_i32 : i32 to index
    %c0_34 = arith.constant 0 : index
    %c0_35 = arith.constant 0 : index
    %91 = vector.load %arg2[%90, %c0_34, %c0_35] : memref<8x8x128xf32, #tpu.memory_space<vmem>>, vector<1x8x128xf32>
    %92 = vector.shape_cast %91 : vector<1x8x128xf32> to vector<8x128xf32>
    %cst_36 = arith.constant dense<0.000000e+00> : vector<8x128xf32>
    %93 = tpu.matmul %85, %3, %cst_36 {dimension_numbers = #tpu.dot_dimension_numbers<[1], [0], [0], [1], [0, 0, 1, 1], [], []>} : vector<8x128xf32>, vector<128x128xf32>, vector<8x128xf32> -> vector<8x128xf32>
    %94 = arith.addf %92, %93 : vector<8x128xf32>
    %cst_37 = arith.constant dense<0.000000e+00> : vector<8xf32>
    %95 = vector.multi_reduction <add>, %94, %cst_37 [1] : vector<8x128xf32> to vector<8xf32>
    %96 = vector.shape_cast %95 : vector<8xf32> to vector<8x1xf32>
    %cst_38 = arith.constant 3.125000e-02 : f32
    %97 = vector.broadcast %cst_38 : f32 to vector<8x1xf32>
    %98 = arith.mulf %96, %97 : vector<8x1xf32>
    %99 = vector.broadcast %98 : vector<8x1xf32> to vector<8x128xf32>
    %100 = arith.subf %94, %99 : vector<8x128xf32>
    %101 = arith.mulf %100, %16 : vector<8x128xf32>
    %102 = arith.mulf %101, %101 : vector<8x128xf32>
    %cst_39 = arith.constant dense<0.000000e+00> : vector<8xf32>
    %103 = vector.multi_reduction <add>, %102, %cst_39 [1] : vector<8x128xf32> to vector<8xf32>
    %104 = vector.shape_cast %103 : vector<8xf32> to vector<8x1xf32>
    %cst_40 = arith.constant 3.125000e-02 : f32
    %105 = vector.broadcast %cst_40 : f32 to vector<8x1xf32>
    %106 = arith.mulf %104, %105 : vector<8x1xf32>
    %cst_41 = arith.constant 9.99999974E-6 : f32
    %107 = vector.broadcast %cst_41 : f32 to vector<8x1xf32>
    %108 = arith.addf %106, %107 : vector<8x1xf32>
    %109 = math.rsqrt %108 : vector<8x1xf32>
    %110 = vector.broadcast %109 : vector<8x1xf32> to vector<8x128xf32>
    %111 = arith.mulf %100, %110 : vector<8x128xf32>
    %112 = arith.mulf %111, %6 : vector<8x128xf32>
    %113 = arith.addf %112, %9 : vector<8x128xf32>
    %cst_42 = arith.constant 5.000000e-01 : f32
    %114 = vector.broadcast %cst_42 : f32 to vector<8x128xf32>
    %115 = arith.mulf %114, %113 : vector<8x128xf32>
    %cst_43 = arith.constant 0.707106769 : f32
    %116 = vector.broadcast %cst_43 : f32 to vector<8x128xf32>
    %117 = arith.mulf %113, %116 : vector<8x128xf32>
    %118 = math.erf %117 : vector<8x128xf32>
    %cst_44 = arith.constant 1.000000e+00 : f32
    %119 = vector.broadcast %cst_44 : f32 to vector<8x128xf32>
    %120 = arith.addf %119, %118 : vector<8x128xf32>
    %121 = arith.mulf %115, %120 : vector<8x128xf32>
    %122 = arith.index_cast %c2_i32 : i32 to index
    %c0_45 = arith.constant 0 : index
    %c0_46 = arith.constant 0 : index
    %123 = vector.load %arg7[%122, %c0_45, %c0_46] : memref<8x8x128xf32, #tpu.memory_space<vmem>>, vector<1x8x128xf32>
    %124 = vector.shape_cast %123 : vector<1x8x128xf32> to vector<8x128xf32>
    %125 = vector.shape_cast %121 : vector<8x128xf32> to vector<1x8x128xf32>
    tpu.vector_store %arg7[%122, %c0_45, %c0_46], %125 {strides = array<i32>} : memref<8x8x128xf32, #tpu.memory_space<vmem>>, vector<1x8x128xf32>,
    %c3_i32 = arith.constant 3 : i32
    %126 = arith.index_cast %c3_i32 : i32 to index
    %c0_47 = arith.constant 0 : index
    %c0_48 = arith.constant 0 : index
    %127 = vector.load %arg2[%126, %c0_47, %c0_48] : memref<8x8x128xf32, #tpu.memory_space<vmem>>, vector<1x8x128xf32>
    %128 = vector.shape_cast %127 : vector<1x8x128xf32> to vector<8x128xf32>
    %cst_49 = arith.constant dense<0.000000e+00> : vector<8x128xf32>
    %129 = tpu.matmul %121, %3, %cst_49 {dimension_numbers = #tpu.dot_dimension_numbers<[1], [0], [0], [1], [0, 0, 1, 1], [], []>} : vector<8x128xf32>, vector<128x128xf32>, vector<8x128xf32> -> vector<8x128xf32>
    %130 = arith.addf %128, %129 : vector<8x128xf32>
    %cst_50 = arith.constant dense<0.000000e+00> : vector<8xf32>
    %131 = vector.multi_reduction <add>, %130, %cst_50 [1] : vector<8x128xf32> to vector<8xf32>
    %132 = vector.shape_cast %131 : vector<8xf32> to vector<8x1xf32>
    %cst_51 = arith.constant 3.125000e-02 : f32
    %133 = vector.broadcast %cst_51 : f32 to vector<8x1xf32>
    %134 = arith.mulf %132, %133 : vector<8x1xf32>
    %135 = vector.broadcast %134 : vector<8x1xf32> to vector<8x128xf32>
    %136 = arith.subf %130, %135 : vector<8x128xf32>
    %137 = arith.mulf %136, %16 : vector<8x128xf32>
    %138 = arith.mulf %137, %137 : vector<8x128xf32>
    %cst_52 = arith.constant dense<0.000000e+00> : vector<8xf32>
    %139 = vector.multi_reduction <add>, %138, %cst_52 [1] : vector<8x128xf32> to vector<8xf32>
    %140 = vector.shape_cast %139 : vector<8xf32> to vector<8x1xf32>
    %cst_53 = arith.constant 3.125000e-02 : f32
    %141 = vector.broadcast %cst_53 : f32 to vector<8x1xf32>
    %142 = arith.mulf %140, %141 : vector<8x1xf32>
    %cst_54 = arith.constant 9.99999974E-6 : f32
    %143 = vector.broadcast %cst_54 : f32 to vector<8x1xf32>
    %144 = arith.addf %142, %143 : vector<8x1xf32>
    %145 = math.rsqrt %144 : vector<8x1xf32>
    %146 = vector.broadcast %145 : vector<8x1xf32> to vector<8x128xf32>
    %147 = arith.mulf %136, %146 : vector<8x128xf32>
    %148 = arith.mulf %147, %6 : vector<8x128xf32>
    %149 = arith.addf %148, %9 : vector<8x128xf32>
    %cst_55 = arith.constant 5.000000e-01 : f32
    %150 = vector.broadcast %cst_55 : f32 to vector<8x128xf32>
    %151 = arith.mulf %150, %149 : vector<8x128xf32>
    %cst_56 = arith.constant 0.707106769 : f32
    %152 = vector.broadcast %cst_56 : f32 to vector<8x128xf32>
    %153 = arith.mulf %149, %152 : vector<8x128xf32>
    %154 = math.erf %153 : vector<8x128xf32>
    %cst_57 = arith.constant 1.000000e+00 : f32
    %155 = vector.broadcast %cst_57 : f32 to vector<8x128xf32>
    %156 = arith.addf %155, %154 : vector<8x128xf32>
    %157 = arith.mulf %151, %156 : vector<8x128xf32>
    %158 = arith.index_cast %c3_i32 : i32 to index
    %c0_58 = arith.constant 0 : index
    %c0_59 = arith.constant 0 : index
    %159 = vector.load %arg7[%158, %c0_58, %c0_59] : memref<8x8x128xf32, #tpu.memory_space<vmem>>, vector<1x8x128xf32>
    %160 = vector.shape_cast %159 : vector<1x8x128xf32> to vector<8x128xf32>
    %161 = vector.shape_cast %157 : vector<8x128xf32> to vector<1x8x128xf32>
    tpu.vector_store %arg7[%158, %c0_58, %c0_59], %161 {strides = array<i32>} : memref<8x8x128xf32, #tpu.memory_space<vmem>>, vector<1x8x128xf32>,
    %c4_i32 = arith.constant 4 : i32
    %162 = arith.index_cast %c4_i32 : i32 to index
    %c0_60 = arith.constant 0 : index
    %c0_61 = arith.constant 0 : index
    %163 = vector.load %arg2[%162, %c0_60, %c0_61] : memref<8x8x128xf32, #tpu.memory_space<vmem>>, vector<1x8x128xf32>
    %164 = vector.shape_cast %163 : vector<1x8x128xf32> to vector<8x128xf32>
    %cst_62 = arith.constant dense<0.000000e+00> : vector<8x128xf32>
    %165 = tpu.matmul %157, %3, %cst_62 {dimension_numbers = #tpu.dot_dimension_numbers<[1], [0], [0], [1], [0, 0, 1, 1], [], []>} : vector<8x128xf32>, vector<128x128xf32>, vector<8x128xf32> -> vector<8x128xf32>
    %166 = arith.addf %164, %165 : vector<8x128xf32>
    %cst_63 = arith.constant dense<0.000000e+00> : vector<8xf32>
    %167 = vector.multi_reduction <add>, %166, %cst_63 [1] : vector<8x128xf32> to vector<8xf32>
    %168 = vector.shape_cast %167 : vector<8xf32> to vector<8x1xf32>
    %cst_64 = arith.constant 3.125000e-02 : f32
    %169 = vector.broadcast %cst_64 : f32 to vector<8x1xf32>
    %170 = arith.mulf %168, %169 : vector<8x1xf32>
    %171 = vector.broadcast %170 : vector<8x1xf32> to vector<8x128xf32>
    %172 = arith.subf %166, %171 : vector<8x128xf32>
    %173 = arith.mulf %172, %16 : vector<8x128xf32>
    %174 = arith.mulf %173, %173 : vector<8x128xf32>
    %cst_65 = arith.constant dense<0.000000e+00> : vector<8xf32>
    %175 = vector.multi_reduction <add>, %174, %cst_65 [1] : vector<8x128xf32> to vector<8xf32>
    %176 = vector.shape_cast %175 : vector<8xf32> to vector<8x1xf32>
    %cst_66 = arith.constant 3.125000e-02 : f32
    %177 = vector.broadcast %cst_66 : f32 to vector<8x1xf32>
    %178 = arith.mulf %176, %177 : vector<8x1xf32>
    %cst_67 = arith.constant 9.99999974E-6 : f32
    %179 = vector.broadcast %cst_67 : f32 to vector<8x1xf32>
    %180 = arith.addf %178, %179 : vector<8x1xf32>
    %181 = math.rsqrt %180 : vector<8x1xf32>
    %182 = vector.broadcast %181 : vector<8x1xf32> to vector<8x128xf32>
    %183 = arith.mulf %172, %182 : vector<8x128xf32>
    %184 = arith.mulf %183, %6 : vector<8x128xf32>
    %185 = arith.addf %184, %9 : vector<8x128xf32>
    %cst_68 = arith.constant 5.000000e-01 : f32
    %186 = vector.broadcast %cst_68 : f32 to vector<8x128xf32>
    %187 = arith.mulf %186, %185 : vector<8x128xf32>
    %cst_69 = arith.constant 0.707106769 : f32
    %188 = vector.broadcast %cst_69 : f32 to vector<8x128xf32>
    %189 = arith.mulf %185, %188 : vector<8x128xf32>
    %190 = math.erf %189 : vector<8x128xf32>
    %cst_70 = arith.constant 1.000000e+00 : f32
    %191 = vector.broadcast %cst_70 : f32 to vector<8x128xf32>
    %192 = arith.addf %191, %190 : vector<8x128xf32>
    %193 = arith.mulf %187, %192 : vector<8x128xf32>
    %194 = arith.index_cast %c4_i32 : i32 to index
    %c0_71 = arith.constant 0 : index
    %c0_72 = arith.constant 0 : index
    %195 = vector.load %arg7[%194, %c0_71, %c0_72] : memref<8x8x128xf32, #tpu.memory_space<vmem>>, vector<1x8x128xf32>
    %196 = vector.shape_cast %195 : vector<1x8x128xf32> to vector<8x128xf32>
    %197 = vector.shape_cast %193 : vector<8x128xf32> to vector<1x8x128xf32>
    tpu.vector_store %arg7[%194, %c0_71, %c0_72], %197 {strides = array<i32>} : memref<8x8x128xf32, #tpu.memory_space<vmem>>, vector<1x8x128xf32>,
    %c5_i32 = arith.constant 5 : i32
    %198 = arith.index_cast %c5_i32 : i32 to index
    %c0_73 = arith.constant 0 : index
    %c0_74 = arith.constant 0 : index
    %199 = vector.load %arg2[%198, %c0_73, %c0_74] : memref<8x8x128xf32, #tpu.memory_space<vmem>>, vector<1x8x128xf32>
    %200 = vector.shape_cast %199 : vector<1x8x128xf32> to vector<8x128xf32>
    %cst_75 = arith.constant dense<0.000000e+00> : vector<8x128xf32>
    %201 = tpu.matmul %193, %3, %cst_75 {dimension_numbers = #tpu.dot_dimension_numbers<[1], [0], [0], [1], [0, 0, 1, 1], [], []>} : vector<8x128xf32>, vector<128x128xf32>, vector<8x128xf32> -> vector<8x128xf32>
    %202 = arith.addf %200, %201 : vector<8x128xf32>
    %cst_76 = arith.constant dense<0.000000e+00> : vector<8xf32>
    %203 = vector.multi_reduction <add>, %202, %cst_76 [1] : vector<8x128xf32> to vector<8xf32>
    %204 = vector.shape_cast %203 : vector<8xf32> to vector<8x1xf32>
    %cst_77 = arith.constant 3.125000e-02 : f32
    %205 = vector.broadcast %cst_77 : f32 to vector<8x1xf32>
    %206 = arith.mulf %204, %205 : vector<8x1xf32>
    %207 = vector.broadcast %206 : vector<8x1xf32> to vector<8x128xf32>
    %208 = arith.subf %202, %207 : vector<8x128xf32>
    %209 = arith.mulf %208, %16 : vector<8x128xf32>
    %210 = arith.mulf %209, %209 : vector<8x128xf32>
    %cst_78 = arith.constant dense<0.000000e+00> : vector<8xf32>
    %211 = vector.multi_reduction <add>, %210, %cst_78 [1] : vector<8x128xf32> to vector<8xf32>
    %212 = vector.shape_cast %211 : vector<8xf32> to vector<8x1xf32>
    %cst_79 = arith.constant 3.125000e-02 : f32
    %213 = vector.broadcast %cst_79 : f32 to vector<8x1xf32>
    %214 = arith.mulf %212, %213 : vector<8x1xf32>
    %cst_80 = arith.constant 9.99999974E-6 : f32
    %215 = vector.broadcast %cst_80 : f32 to vector<8x1xf32>
    %216 = arith.addf %214, %215 : vector<8x1xf32>
    %217 = math.rsqrt %216 : vector<8x1xf32>
    %218 = vector.broadcast %217 : vector<8x1xf32> to vector<8x128xf32>
    %219 = arith.mulf %208, %218 : vector<8x128xf32>
    %220 = arith.mulf %219, %6 : vector<8x128xf32>
    %221 = arith.addf %220, %9 : vector<8x128xf32>
    %cst_81 = arith.constant 5.000000e-01 : f32
    %222 = vector.broadcast %cst_81 : f32 to vector<8x128xf32>
    %223 = arith.mulf %222, %221 : vector<8x128xf32>
    %cst_82 = arith.constant 0.707106769 : f32
    %224 = vector.broadcast %cst_82 : f32 to vector<8x128xf32>
    %225 = arith.mulf %221, %224 : vector<8x128xf32>
    %226 = math.erf %225 : vector<8x128xf32>
    %cst_83 = arith.constant 1.000000e+00 : f32
    %227 = vector.broadcast %cst_83 : f32 to vector<8x128xf32>
    %228 = arith.addf %227, %226 : vector<8x128xf32>
    %229 = arith.mulf %223, %228 : vector<8x128xf32>
    %230 = arith.index_cast %c5_i32 : i32 to index
    %c0_84 = arith.constant 0 : index
    %c0_85 = arith.constant 0 : index
    %231 = vector.load %arg7[%230, %c0_84, %c0_85] : memref<8x8x128xf32, #tpu.memory_space<vmem>>, vector<1x8x128xf32>
    %232 = vector.shape_cast %231 : vector<1x8x128xf32> to vector<8x128xf32>
    %233 = vector.shape_cast %229 : vector<8x128xf32> to vector<1x8x128xf32>
    tpu.vector_store %arg7[%230, %c0_84, %c0_85], %233 {strides = array<i32>} : memref<8x8x128xf32, #tpu.memory_space<vmem>>, vector<1x8x128xf32>,
    %c6_i32 = arith.constant 6 : i32
    %234 = arith.index_cast %c6_i32 : i32 to index
    %c0_86 = arith.constant 0 : index
    %c0_87 = arith.constant 0 : index
    %235 = vector.load %arg2[%234, %c0_86, %c0_87] : memref<8x8x128xf32, #tpu.memory_space<vmem>>, vector<1x8x128xf32>
    %236 = vector.shape_cast %235 : vector<1x8x128xf32> to vector<8x128xf32>
    %cst_88 = arith.constant dense<0.000000e+00> : vector<8x128xf32>
    %237 = tpu.matmul %229, %3, %cst_88 {dimension_numbers = #tpu.dot_dimension_numbers<[1], [0], [0], [1], [0, 0, 1, 1], [], []>} : vector<8x128xf32>, vector<128x128xf32>, vector<8x128xf32> -> vector<8x128xf32>
    %238 = arith.addf %236, %237 : vector<8x128xf32>
    %cst_89 = arith.constant dense<0.000000e+00> : vector<8xf32>
    %239 = vector.multi_reduction <add>, %238, %cst_89 [1] : vector<8x128xf32> to vector<8xf32>
    %240 = vector.shape_cast %239 : vector<8xf32> to vector<8x1xf32>
    %cst_90 = arith.constant 3.125000e-02 : f32
    %241 = vector.broadcast %cst_90 : f32 to vector<8x1xf32>
    %242 = arith.mulf %240, %241 : vector<8x1xf32>
    %243 = vector.broadcast %242 : vector<8x1xf32> to vector<8x128xf32>
    %244 = arith.subf %238, %243 : vector<8x128xf32>
    %245 = arith.mulf %244, %16 : vector<8x128xf32>
    %246 = arith.mulf %245, %245 : vector<8x128xf32>
    %cst_91 = arith.constant dense<0.000000e+00> : vector<8xf32>
    %247 = vector.multi_reduction <add>, %246, %cst_91 [1] : vector<8x128xf32> to vector<8xf32>
    %248 = vector.shape_cast %247 : vector<8xf32> to vector<8x1xf32>
    %cst_92 = arith.constant 3.125000e-02 : f32
    %249 = vector.broadcast %cst_92 : f32 to vector<8x1xf32>
    %250 = arith.mulf %248, %249 : vector<8x1xf32>
    %cst_93 = arith.constant 9.99999974E-6 : f32
    %251 = vector.broadcast %cst_93 : f32 to vector<8x1xf32>
    %252 = arith.addf %250, %251 : vector<8x1xf32>
    %253 = math.rsqrt %252 : vector<8x1xf32>
    %254 = vector.broadcast %253 : vector<8x1xf32> to vector<8x128xf32>
    %255 = arith.mulf %244, %254 : vector<8x128xf32>
    %256 = arith.mulf %255, %6 : vector<8x128xf32>
    %257 = arith.addf %256, %9 : vector<8x128xf32>
    %cst_94 = arith.constant 5.000000e-01 : f32
    %258 = vector.broadcast %cst_94 : f32 to vector<8x128xf32>
    %259 = arith.mulf %258, %257 : vector<8x128xf32>
    %cst_95 = arith.constant 0.707106769 : f32
    %260 = vector.broadcast %cst_95 : f32 to vector<8x128xf32>
    %261 = arith.mulf %257, %260 : vector<8x128xf32>
    %262 = math.erf %261 : vector<8x128xf32>
    %cst_96 = arith.constant 1.000000e+00 : f32
    %263 = vector.broadcast %cst_96 : f32 to vector<8x128xf32>
    %264 = arith.addf %263, %262 : vector<8x128xf32>
    %265 = arith.mulf %259, %264 : vector<8x128xf32>
    %266 = arith.index_cast %c6_i32 : i32 to index
    %c0_97 = arith.constant 0 : index
    %c0_98 = arith.constant 0 : index
    %267 = vector.load %arg7[%266, %c0_97, %c0_98] : memref<8x8x128xf32, #tpu.memory_space<vmem>>, vector<1x8x128xf32>
    %268 = vector.shape_cast %267 : vector<1x8x128xf32> to vector<8x128xf32>
    %269 = vector.shape_cast %265 : vector<8x128xf32> to vector<1x8x128xf32>
    tpu.vector_store %arg7[%266, %c0_97, %c0_98], %269 {strides = array<i32>} : memref<8x8x128xf32, #tpu.memory_space<vmem>>, vector<1x8x128xf32>,
    %c7_i32 = arith.constant 7 : i32
    %270 = arith.index_cast %c7_i32 : i32 to index
    %c0_99 = arith.constant 0 : index
    %c0_100 = arith.constant 0 : index
    %271 = vector.load %arg2[%270, %c0_99, %c0_100] : memref<8x8x128xf32, #tpu.memory_space<vmem>>, vector<1x8x128xf32>
    %272 = vector.shape_cast %271 : vector<1x8x128xf32> to vector<8x128xf32>
    %cst_101 = arith.constant dense<0.000000e+00> : vector<8x128xf32>
    %273 = tpu.matmul %265, %3, %cst_101 {dimension_numbers = #tpu.dot_dimension_numbers<[1], [0], [0], [1], [0, 0, 1, 1], [], []>} : vector<8x128xf32>, vector<128x128xf32>, vector<8x128xf32> -> vector<8x128xf32>
    %274 = arith.addf %272, %273 : vector<8x128xf32>
    %cst_102 = arith.constant dense<0.000000e+00> : vector<8xf32>
    %275 = vector.multi_reduction <add>, %274, %cst_102 [1] : vector<8x128xf32> to vector<8xf32>
    %276 = vector.shape_cast %275 : vector<8xf32> to vector<8x1xf32>
    %cst_103 = arith.constant 3.125000e-02 : f32
    %277 = vector.broadcast %cst_103 : f32 to vector<8x1xf32>
    %278 = arith.mulf %276, %277 : vector<8x1xf32>
    %279 = vector.broadcast %278 : vector<8x1xf32> to vector<8x128xf32>
    %280 = arith.subf %274, %279 : vector<8x128xf32>
    %281 = arith.mulf %280, %16 : vector<8x128xf32>
    %282 = arith.mulf %281, %281 : vector<8x128xf32>
    %cst_104 = arith.constant dense<0.000000e+00> : vector<8xf32>
    %283 = vector.multi_reduction <add>, %282, %cst_104 [1] : vector<8x128xf32> to vector<8xf32>
    %284 = vector.shape_cast %283 : vector<8xf32> to vector<8x1xf32>
    %cst_105 = arith.constant 3.125000e-02 : f32
    %285 = vector.broadcast %cst_105 : f32 to vector<8x1xf32>
    %286 = arith.mulf %284, %285 : vector<8x1xf32>
    %cst_106 = arith.constant 9.99999974E-6 : f32
    %287 = vector.broadcast %cst_106 : f32 to vector<8x1xf32>
    %288 = arith.addf %286, %287 : vector<8x1xf32>
    %289 = math.rsqrt %288 : vector<8x1xf32>
    %290 = vector.broadcast %289 : vector<8x1xf32> to vector<8x128xf32>
    %291 = arith.mulf %280, %290 : vector<8x128xf32>
    %292 = arith.mulf %291, %6 : vector<8x128xf32>
    %293 = arith.addf %292, %9 : vector<8x128xf32>
    %cst_107 = arith.constant 5.000000e-01 : f32
    %294 = vector.broadcast %cst_107 : f32 to vector<8x128xf32>
    %295 = arith.mulf %294, %293 : vector<8x128xf32>
    %cst_108 = arith.constant 0.707106769 : f32
    %296 = vector.broadcast %cst_108 : f32 to vector<8x128xf32>
    %297 = arith.mulf %293, %296 : vector<8x128xf32>
    %298 = math.erf %297 : vector<8x128xf32>
    %cst_109 = arith.constant 1.000000e+00 : f32
    %299 = vector.broadcast %cst_109 : f32 to vector<8x128xf32>
    %300 = arith.addf %299, %298 : vector<8x128xf32>
    %301 = arith.mulf %295, %300 : vector<8x128xf32>
    %302 = arith.index_cast %c7_i32 : i32 to index
    %c0_110 = arith.constant 0 : index
    %c0_111 = arith.constant 0 : index
    %303 = vector.load %arg7[%302, %c0_110, %c0_111] : memref<8x8x128xf32, #tpu.memory_space<vmem>>, vector<1x8x128xf32>
    %304 = vector.shape_cast %303 : vector<1x8x128xf32> to vector<8x128xf32>
    %305 = vector.shape_cast %301 : vector<8x128xf32> to vector<1x8x128xf32>
    tpu.vector_store %arg7[%302, %c0_110, %c0_111], %305 {strides = array<i32>} : memref<8x8x128xf32, #tpu.memory_space<vmem>>, vector<1x8x128xf32>,
    %c8_i32 = arith.constant 8 : i32
    %c0_112 = arith.constant 0 : index
    %c0_113 = arith.constant 0 : index
    %306 = vector.load %arg8[%c0_112, %c0_113] : memref<8x128xf32, #tpu.memory_space<vmem>>, vector<8x128xf32>
    tpu.vector_store %arg8[%c0_112, %c0_113], %301 {strides = array<i32>} : memref<8x128xf32, #tpu.memory_space<vmem>>, vector<8x128xf32>,
    return
  }
  func.func @transform_0(%arg0: i32, %arg1: i32) -> (i32, i32, i32) {
    %c0_i32 = arith.constant 0 : i32
    %c0_i32_0 = arith.constant 0 : i32
    return %arg1, %arg0, %c0_i32 : i32, i32, i32
  }
  func.func @transform_1(%arg0: i32, %arg1: i32) -> (i32, i32) {
    %c0_i32 = arith.constant 0 : i32
    %c0_i32_0 = arith.constant 0 : i32
    %c0_i32_1 = arith.constant 0 : i32
    return %c0_i32, %c0_i32_0 : i32, i32
  }
  func.func @transform_2(%arg0: i32, %arg1: i32) -> (i32, i32) {
    %c0_i32 = arith.constant 0 : i32
    %c0_i32_0 = arith.constant 0 : i32
    %c0_i32_1 = arith.constant 0 : i32
    return %c0_i32, %c0_i32_0 : i32, i32
  }
  func.func @transform_3(%arg0: i32, %arg1: i32) -> (i32, i32) {
    %c0_i32 = arith.constant 0 : i32
    %c0_i32_0 = arith.constant 0 : i32
    %c0_i32_1 = arith.constant 0 : i32
    return %c0_i32, %c0_i32_0 : i32, i32
  }
  func.func @transform_4(%arg0: i32, %arg1: i32) -> (i32, i32) {
    %c0_i32 = arith.constant 0 : i32
    %c0_i32_0 = arith.constant 0 : i32
    %c0_i32_1 = arith.constant 0 : i32
    return %c0_i32, %c0_i32_0 : i32, i32
  }
  func.func @transform_5(%arg0: i32, %arg1: i32) -> (i32, i32, i32) {
    %c0_i32 = arith.constant 0 : i32
    %c0_i32_0 = arith.constant 0 : i32
    return %arg1, %arg0, %c0_i32 : i32, i32, i32
  }
}

</mosaic_0001>

<llo_original>
// kernel: rnn_layer_forward.1
$region0: #{rnn_layer_forward.1}
  #allocation0 [shape = 'u32[]', space=smem, size = 0x4, offset = 0x4, fixed_abs, tag = 'smem constant byte address 0x4 - core index']
  #allocation1 [shape = 'u32[144,128]{1,0:T(1,128)}', space=vmem, size = 0x12000, scoped, tag = 'internal scratch']
  #allocation2 [shape = 'f32[8,128]{1,0:T(8,128)}', space=vmem, size = 0x1000, scoped, tag = 'scratch operand']
  %s0 = inlined_call_operand.vmem [shape: f32[8,8,128], index: 0, kind: input, shape index: {}]
  %s1 = inlined_call_operand.vmem [shape: f32[1,128], index: 1, kind: input, shape index: {}]
  %s2 = inlined_call_operand.vmem [shape: f32[128,128], index: 2, kind: input, shape index: {}]
  %s3 = inlined_call_operand.vmem [shape: f32[1,128], index: 3, kind: input, shape index: {}]
  %s4 = inlined_call_operand.vmem [shape: f32[1,128], index: 4, kind: input, shape index: {}]
  %s5 = inlined_call_operand.vmem [shape: f32[8,8,128], index: 5, kind: output, shape index: {}]
  %s6 = sld [smem:[#allocation0]]
  $region34: #{rnn_layer_forward.1} parent=0
    _
  %s8 = ssub.s32 1, %s6
  %s9 = scalar_select 0, %s8, %s6
  // Predicated region
  $region2: #{rnn_layer_forward.1} parent=0 // pred_check
    _
  $region3: #{rnn_layer_forward.1} parent=0 // pred_check_branch
    %11 = sbr.rel (0) target = $region5
  $region4: #{rnn_layer_forward.1} parent=0 // pred_region
    _
  $region5: #{rnn_layer_forward.1} parent=0 // pred_fallthru
    _
  // Predicated region
  $region6: #{rnn_layer_forward.1} parent=0 // pred_check
    _
  $region7: #{rnn_layer_forward.1} parent=0 // pred_check_branch
    %13 = sbr.rel (0) target = $region9
  $region8: #{rnn_layer_forward.1} parent=0 // pred_region
    _
  $region9: #{rnn_layer_forward.1} parent=0 // pred_fallthru
    _
  // Predicated region
  $region10: #{rnn_layer_forward.1} parent=0 // pred_check
    _
  $region11: #{rnn_layer_forward.1} parent=0 // pred_check_branch
    %15 = sbr.rel (0) target = $region13
  $region12: #{rnn_layer_forward.1} parent=0 // pred_region
    _
  $region13: #{rnn_layer_forward.1} parent=0 // pred_fallthru
    _
  // Predicated region
  $region14: #{rnn_layer_forward.1} parent=0 // pred_check
    _
  $region15: #{rnn_layer_forward.1} parent=0 // pred_check_branch
    %17 = sbr.rel (0) target = $region17
  $region16: #{rnn_layer_forward.1} parent=0 // pred_region
    _
  $region17: #{rnn_layer_forward.1} parent=0 // pred_fallthru
    _
  // Predicated region
  $region18: #{rnn_layer_forward.1} parent=0 // pred_check
    _
  $region19: #{rnn_layer_forward.1} parent=0 // pred_check_branch
    %19 = sbr.rel (0) target = $region21
  $region20: #{rnn_layer_forward.1} parent=0 // pred_region
    _
  $region21: #{rnn_layer_forward.1} parent=0 // pred_fallthru
    _
  %p20 = scmp.eq.s32.totalorder 0, 0
  // Predicated region
  $region22: #{rnn_layer_forward.1} parent=0 // pred_check
    %p21 = pneg %p20
  $region23: #{rnn_layer_forward.1} parent=0 // pred_check_branch
    %23 = sbr.rel (%p21) target = $region25
  $region24: #{rnn_layer_forward.1} parent=0 // pred_region
    %v24 = vld [vmem:[%s1] sm:$0x1]
    %v26 = vlaneseq
    %v27 = vshrl.u32 %v26, 7
    %v28 = vsub.s32 0, %v27
    %v29 = vrot.slane %v24, %v28
    %31 = vst [vmem:[#allocation2] sm:$0xff] %v29
  $region25: #{rnn_layer_forward.1} parent=0 // pred_fallthru
    _
  %v32 = vld [vmem:[%s2] sm:$0xff]
  %v33 = vld [vmem:[%s2 + $0x8] sm:$0xff]
  %v34 = vld [vmem:[%s2 + $0x10] sm:$0xff]
  %v35 = vld [vmem:[%s2 + $0x18] sm:$0xff]
  %v36 = vld [vmem:[%s2 + $0x20] sm:$0xff]
  %v37 = vld [vmem:[%s2 + $0x28] sm:$0xff]
  %v38 = vld [vmem:[%s2 + $0x30] sm:$0xff]
  %v39 = vld [vmem:[%s2 + $0x38] sm:$0xff]
  %v40 = vld [vmem:[%s2 + $0x40] sm:$0xff]
  %v41 = vld [vmem:[%s2 + $0x48] sm:$0xff]
  %v42 = vld [vmem:[%s2 + $0x50] sm:$0xff]
  %v43 = vld [vmem:[%s2 + $0x58] sm:$0xff]
  %v44 = vld [vmem:[%s2 + $0x60] sm:$0xff]
  %v45 = vld [vmem:[%s2 + $0x68] sm:$0xff]
  %v46 = vld [vmem:[%s2 + $0x70] sm:$0xff]
  %v47 = vld [vmem:[%s2 + $0x78] sm:$0xff]
  %v48 = vld [vmem:[%s3] sm:$0x1]
  %v50 = vlaneseq
  %v51 = vshrl.u32 %v50, 7
  %v52 = vsub.s32 0, %v51
  %v53 = vrot.slane %v48, %v52
  %v55 = vld [vmem:[%s4] sm:$0x1]
  %v57 = vlaneseq
  %v58 = vshrl.u32 %v57, 7
  %v59 = vsub.s32 0, %v58
  %v60 = vrot.slane %v55, %v59
  %v62 = vlaneseq
  %v63 = vand.u32 %v62, 127
  %vm64 = vcmp.lt.s32.totalorder %v63, 32
  %v65 = vsel %vm64, 1, 0
  %v66 = vcvt.s32.f32 %v65
  %v67 = vld [vmem:[#allocation2] sm:$0xff]
  %v68 = vld [vmem:[%s0] sm:$0xff]
  %69 = vmatprep.subr.mxu0 0.0
  %70 = vmatpush1.msra.mxu0 %v32
  %71 = vmatprep.subr.mxu0 0.0
  %72 = vmatpush1.msra.mxu0 %v33
  %73 = vmatprep.subr.mxu0 0.0
  %74 = vmatpush1.msra.mxu0 %v34
  %75 = vmatprep.subr.mxu0 0.0
  %76 = vmatpush1.msra.mxu0 %v35
  %77 = vmatprep.subr.mxu0 0.0
  %78 = vmatpush1.msra.mxu0 %v36
  %79 = vmatprep.subr.mxu0 0.0
  %80 = vmatpush1.msra.mxu0 %v37
  %81 = vmatprep.subr.mxu0 0.0
  %82 = vmatpush1.msra.mxu0 %v38
  %83 = vmatprep.subr.mxu0 0.0
  %84 = vmatpush1.msra.mxu0 %v39
  %85 = vmatprep.subr.mxu0 0.0
  %86 = vmatpush1.msra.mxu0 %v40
  %87 = vmatprep.subr.mxu0 0.0
  %88 = vmatpush1.msra.mxu0 %v41
  %89 = vmatprep.subr.mxu0 0.0
  %90 = vmatpush1.msra.mxu0 %v42
  %91 = vmatprep.subr.mxu0 0.0
  %92 = vmatpush1.msra.mxu0 %v43
  %93 = vmatprep.subr.mxu0 0.0
  %94 = vmatpush1.msra.mxu0 %v44
  %95 = vmatprep.subr.mxu0 0.0
  %96 = vmatpush1.msra.mxu0 %v45
  %97 = vmatprep.subr.mxu0 0.0
  %98 = vmatpush1.msra.mxu0 %v46
  %99 = vmatprep.subr.mxu0 0.0
  %100 = vmatpush1.msra.mxu0 %v47
  %101 = vmatprep.subr.mxu0 0.0
  %102 = vmatpush1.msra.mxu0 0.0
  %103 = vmatprep.subr.mxu0 0.0
  %104 = vmatpush1.msra.mxu0 0.0
  %105 = vmatprep.subr.mxu0 0.0
  %106 = vmatpush1.msra.mxu0 0.0
  %107 = vmatprep.subr.mxu0 0.0
  %108 = vmatpush1.msra.mxu0 0.0
  %109 = vmatprep.subr.mxu0 0.0
  %110 = vmatpush1.msra.mxu0 0.0
  %111 = vmatprep.subr.mxu0 0.0
  %112 = vmatpush1.msra.mxu0 0.0
  %113 = vmatprep.subr.mxu0 0.0
  %114 = vmatpush1.msra.mxu0 0.0
  %115 = vmatprep.subr.mxu0 0.0
  %116 = vmatpush1.msra.mxu0 0.0
  %117 = vmatprep.subr.mxu0 0.0
  %118 = vmatpush1.msra.mxu0 0.0
  %119 = vmatprep.subr.mxu0 0.0
  %120 = vmatpush1.msra.mxu0 0.0
  %121 = vmatprep.subr.mxu0 0.0
  %122 = vmatpush1.msra.mxu0 0.0
  %123 = vmatprep.subr.mxu0 0.0
  %124 = vmatpush1.msra.mxu0 0.0
  %125 = vmatprep.subr.mxu0 0.0
  %126 = vmatpush1.msra.mxu0 0.0
  %127 = vmatprep.subr.mxu0 0.0
  %128 = vmatpush1.msra.mxu0 0.0
  %129 = vmatprep.subr.mxu0 0.0
  %130 = vmatpush1.msra.mxu0 0.0
  %131 = vmatprep.subr.mxu0 0.0
  %132 = vmatpush1.msra.mxu0 0.0
  %133 = vmatprep.mubr.f32.mxu0 0.0
  %134 = vmatmul.mubr.f32.gmra.mrb[0].mxu0 %v67
  %v135 = vpop.f32.mrb[0].mxu0
  %v136 = vadd.f32 0.0, %v135
  %v137 = vpop.f32.mrb[0].mxu0
  %138 = vdwg.mxu0
  %v139 = vadd.f32 %v68, %v136
  %140 = vadd.xlane.f32.xlu0 %v139
  %v141 = vpop.xlane.xlu0 %140
  %v142 = vmul.f32 %v141, 0.03125
  %v143 = vsub.f32 %v139, %v142
  %v144 = vmul.f32 %v143, %v66
  %v145 = vmul.f32 %v144, %v144
  %146 = vadd.xlane.f32.xlu0 %v145
  %v147 = vpop.xlane.xlu0 %146
  %v148 = vmul.f32 %v147, 0.03125
  %v149 = vadd.f32 %v148, 1e-05
  %v150 = vrsqrt.pop %v149
  %v151 = vmul.f32 %v143, %v150
  %v152 = vmul.f32 %v151, %v53
  %v153 = vadd.f32 %v152, %v60
  %v154 = vmul.f32 %v153, 0.5
  %v155 = vmul.f32 %v153, 0.70710677
  %v156 = verf.f32.pop %v155
  %v157 = vadd.f32 %v156, 1.0
  %v158 = vmul.f32 %v154, %v157
  %159 = vst [vmem:[%s5] sm:$0xff] %v158
  %s160 = scalar_lea.vmem %s0, 8
  %v161 = vld [vmem:[%s160] sm:$0xff]
  %162 = vmatprep.subr.mxu0 0.0
  %163 = vmatpush1.msra.mxu0 %v32
  %164 = vmatprep.subr.mxu0 0.0
  %165 = vmatpush1.msra.mxu0 %v33
  %166 = vmatprep.subr.mxu0 0.0
  %167 = vmatpush1.msra.mxu0 %v34
  %168 = vmatprep.subr.mxu0 0.0
  %169 = vmatpush1.msra.mxu0 %v35
  %170 = vmatprep.subr.mxu0 0.0
  %171 = vmatpush1.msra.mxu0 %v36
  %172 = vmatprep.subr.mxu0 0.0
  %173 = vmatpush1.msra.mxu0 %v37
  %174 = vmatprep.subr.mxu0 0.0
  %175 = vmatpush1.msra.mxu0 %v38
  %176 = vmatprep.subr.mxu0 0.0
  %177 = vmatpush1.msra.mxu0 %v39
  %178 = vmatprep.subr.mxu0 0.0
  %179 = vmatpush1.msra.mxu0 %v40
  %180 = vmatprep.subr.mxu0 0.0
  %181 = vmatpush1.msra.mxu0 %v41
  %182 = vmatprep.subr.mxu0 0.0
  %183 = vmatpush1.msra.mxu0 %v42
  %184 = vmatprep.subr.mxu0 0.0
  %185 = vmatpush1.msra.mxu0 %v43
  %186 = vmatprep.subr.mxu0 0.0
  %187 = vmatpush1.msra.mxu0 %v44
  %188 = vmatprep.subr.mxu0 0.0
  %189 = vmatpush1.msra.mxu0 %v45
  %190 = vmatprep.subr.mxu0 0.0
  %191 = vmatpush1.msra.mxu0 %v46
  %192 = vmatprep.subr.mxu0 0.0
  %193 = vmatpush1.msra.mxu0 %v47
  %194 = vmatprep.subr.mxu0 0.0
  %195 = vmatpush1.msra.mxu0 0.0
  %196 = vmatprep.subr.mxu0 0.0
  %197 = vmatpush1.msra.mxu0 0.0
  %198 = vmatprep.subr.mxu0 0.0
  %199 = vmatpush1.msra.mxu0 0.0
  %200 = vmatprep.subr.mxu0 0.0
  %201 = vmatpush1.msra.mxu0 0.0
  %202 = vmatprep.subr.mxu0 0.0
  %203 = vmatpush1.msra.mxu0 0.0
  %204 = vmatprep.subr.mxu0 0.0
  %205 = vmatpush1.msra.mxu0 0.0
  %206 = vmatprep.subr.mxu0 0.0
  %207 = vmatpush1.msra.mxu0 0.0
  %208 = vmatprep.subr.mxu0 0.0
  %209 = vmatpush1.msra.mxu0 0.0
  %210 = vmatprep.subr.mxu0 0.0
  %211 = vmatpush1.msra.mxu0 0.0
  %212 = vmatprep.subr.mxu0 0.0
  %213 = vmatpush1.msra.mxu0 0.0
  %214 = vmatprep.subr.mxu0 0.0
  %215 = vmatpush1.msra.mxu0 0.0
  %216 = vmatprep.subr.mxu0 0.0
  %217 = vmatpush1.msra.mxu0 0.0
  %218 = vmatprep.subr.mxu0 0.0
  %219 = vmatpush1.msra.mxu0 0.0
  %220 = vmatprep.subr.mxu0 0.0
  %221 = vmatpush1.msra.mxu0 0.0
  %222 = vmatprep.subr.mxu0 0.0
  %223 = vmatpush1.msra.mxu0 0.0
  %224 = vmatprep.subr.mxu0 0.0
  %225 = vmatpush1.msra.mxu0 0.0
  %226 = vmatprep.mubr.f32.mxu0 0.0
  %227 = vmatmul.mubr.f32.gmra.mrb[0].mxu0 %v158
  %v228 = vpop.f32.mrb[0].mxu0
  %v229 = vadd.f32 0.0, %v228
  %v230 = vpop.f32.mrb[0].mxu0
  %231 = vdwg.mxu0
  %v232 = vadd.f32 %v161, %v229
  %233 = vadd.xlane.f32.xlu0 %v232
  %v234 = vpop.xlane.xlu0 %233
  %v235 = vmul.f32 %v234, 0.03125
  %v236 = vsub.f32 %v232, %v235
  %v237 = vmul.f32 %v236, %v66
  %v238 = vmul.f32 %v237, %v237
  %239 = vadd.xlane.f32.xlu0 %v238
  %v240 = vpop.xlane.xlu0 %239
  %v241 = vmul.f32 %v240, 0.03125
  %v242 = vadd.f32 %v241, 1e-05
  %v243 = vrsqrt.pop %v242
  %v244 = vmul.f32 %v236, %v243
  %v245 = vmul.f32 %v244, %v53
  %v246 = vadd.f32 %v245, %v60
  %v247 = vmul.f32 %v246, 0.5
  %v248 = vmul.f32 %v246, 0.70710677
  %v249 = verf.f32.pop %v248
  %v250 = vadd.f32 %v249, 1.0
  %v251 = vmul.f32 %v247, %v250
  %s252 = scalar_lea.vmem %s5, 8
  %253 = vst [vmem:[%s252] sm:$0xff] %v251
  %s254 = scalar_lea.vmem %s0, 16
  %v255 = vld [vmem:[%s254] sm:$0xff]
  %256 = vmatprep.subr.mxu0 0.0
  %257 = vmatpush1.msra.mxu0 %v32
  %258 = vmatprep.subr.mxu0 0.0
  %259 = vmatpush1.msra.mxu0 %v33
  %260 = vmatprep.subr.mxu0 0.0
  %261 = vmatpush1.msra.mxu0 %v34
  %262 = vmatprep.subr.mxu0 0.0
  %263 = vmatpush1.msra.mxu0 %v35
  %264 = vmatprep.subr.mxu0 0.0
  %265 = vmatpush1.msra.mxu0 %v36
  %266 = vmatprep.subr.mxu0 0.0
  %267 = vmatpush1.msra.mxu0 %v37
  %268 = vmatprep.subr.mxu0 0.0
  %269 = vmatpush1.msra.mxu0 %v38
  %270 = vmatprep.subr.mxu0 0.0
  %271 = vmatpush1.msra.mxu0 %v39
  %272 = vmatprep.subr.mxu0 0.0
  %273 = vmatpush1.msra.mxu0 %v40
  %274 = vmatprep.subr.mxu0 0.0
  %275 = vmatpush1.msra.mxu0 %v41
  %276 = vmatprep.subr.mxu0 0.0
  %277 = vmatpush1.msra.mxu0 %v42
  %278 = vmatprep.subr.mxu0 0.0
  %279 = vmatpush1.msra.mxu0 %v43
  %280 = vmatprep.subr.mxu0 0.0
  %281 = vmatpush1.msra.mxu0 %v44
  %282 = vmatprep.subr.mxu0 0.0
  %283 = vmatpush1.msra.mxu0 %v45
  %284 = vmatprep.subr.mxu0 0.0
  %285 = vmatpush1.msra.mxu0 %v46
  %286 = vmatprep.subr.mxu0 0.0
  %287 = vmatpush1.msra.mxu0 %v47
  %288 = vmatprep.subr.mxu0 0.0
  %289 = vmatpush1.msra.mxu0 0.0
  %290 = vmatprep.subr.mxu0 0.0
  %291 = vmatpush1.msra.mxu0 0.0
  %292 = vmatprep.subr.mxu0 0.0
  %293 = vmatpush1.msra.mxu0 0.0
  %294 = vmatprep.subr.mxu0 0.0
  %295 = vmatpush1.msra.mxu0 0.0
  %296 = vmatprep.subr.mxu0 0.0
  %297 = vmatpush1.msra.mxu0 0.0
  %298 = vmatprep.subr.mxu0 0.0
  %299 = vmatpush1.msra.mxu0 0.0
  %300 = vmatprep.subr.mxu0 0.0
  %301 = vmatpush1.msra.mxu0 0.0
  %302 = vmatprep.subr.mxu0 0.0
  %303 = vmatpush1.msra.mxu0 0.0
  %304 = vmatprep.subr.mxu0 0.0
  %305 = vmatpush1.msra.mxu0 0.0
  %306 = vmatprep.subr.mxu0 0.0
  %307 = vmatpush1.msra.mxu0 0.0
  %308 = vmatprep.subr.mxu0 0.0
  %309 = vmatpush1.msra.mxu0 0.0
  %310 = vmatprep.subr.mxu0 0.0
  %311 = vmatpush1.msra.mxu0 0.0
  %312 = vmatprep.subr.mxu0 0.0
  %313 = vmatpush1.msra.mxu0 0.0
  %314 = vmatprep.subr.mxu0 0.0
  %315 = vmatpush1.msra.mxu0 0.0
  %316 = vmatprep.subr.mxu0 0.0
  %317 = vmatpush1.msra.mxu0 0.0
  %318 = vmatprep.subr.mxu0 0.0
  %319 = vmatpush1.msra.mxu0 0.0
  %320 = vmatprep.mubr.f32.mxu0 0.0
  %321 = vmatmul.mubr.f32.gmra.mrb[0].mxu0 %v251
  %v322 = vpop.f32.mrb[0].mxu0
  %v323 = vadd.f32 0.0, %v322
  %v324 = vpop.f32.mrb[0].mxu0
  %325 = vdwg.mxu0
  %v326 = vadd.f32 %v255, %v323
  %327 = vadd.xlane.f32.xlu0 %v326
  %v328 = vpop.xlane.xlu0 %327
  %v329 = vmul.f32 %v328, 0.03125
  %v330 = vsub.f32 %v326, %v329
  %v331 = vmul.f32 %v330, %v66
  %v332 = vmul.f32 %v331, %v331
  %333 = vadd.xlane.f32.xlu0 %v332
  %v334 = vpop.xlane.xlu0 %333
  %v335 = vmul.f32 %v334, 0.03125
  %v336 = vadd.f32 %v335, 1e-05
  %v337 = vrsqrt.pop %v336
  %v338 = vmul.f32 %v330, %v337
  %v339 = vmul.f32 %v338, %v53
  %v340 = vadd.f32 %v339, %v60
  %v341 = vmul.f32 %v340, 0.5
  %v342 = vmul.f32 %v340, 0.70710677
  %v343 = verf.f32.pop %v342
  %v344 = vadd.f32 %v343, 1.0
  %v345 = vmul.f32 %v341, %v344
  %s346 = scalar_lea.vmem %s5, 16
  %347 = vst [vmem:[%s346] sm:$0xff] %v345
  %s348 = scalar_lea.vmem %s0, 24
  %v349 = vld [vmem:[%s348] sm:$0xff]
  %350 = vmatprep.subr.mxu0 0.0
  %351 = vmatpush1.msra.mxu0 %v32
  %352 = vmatprep.subr.mxu0 0.0
  %353 = vmatpush1.msra.mxu0 %v33
  %354 = vmatprep.subr.mxu0 0.0
  %355 = vmatpush1.msra.mxu0 %v34
  %356 = vmatprep.subr.mxu0 0.0
  %357 = vmatpush1.msra.mxu0 %v35
  %358 = vmatprep.subr.mxu0 0.0
  %359 = vmatpush1.msra.mxu0 %v36
  %360 = vmatprep.subr.mxu0 0.0
  %361 = vmatpush1.msra.mxu0 %v37
  %362 = vmatprep.subr.mxu0 0.0
  %363 = vmatpush1.msra.mxu0 %v38
  %364 = vmatprep.subr.mxu0 0.0
  %365 = vmatpush1.msra.mxu0 %v39
  %366 = vmatprep.subr.mxu0 0.0
  %367 = vmatpush1.msra.mxu0 %v40
  %368 = vmatprep.subr.mxu0 0.0
  %369 = vmatpush1.msra.mxu0 %v41
  %370 = vmatprep.subr.mxu0 0.0
  %371 = vmatpush1.msra.mxu0 %v42
  %372 = vmatprep.subr.mxu0 0.0
  %373 = vmatpush1.msra.mxu0 %v43
  %374 = vmatprep.subr.mxu0 0.0
  %375 = vmatpush1.msra.mxu0 %v44
  %376 = vmatprep.subr.mxu0 0.0
  %377 = vmatpush1.msra.mxu0 %v45
  %378 = vmatprep.subr.mxu0 0.0
  %379 = vmatpush1.msra.mxu0 %v46
  %380 = vmatprep.subr.mxu0 0.0
  %381 = vmatpush1.msra.mxu0 %v47
  %382 = vmatprep.subr.mxu0 0.0
  %383 = vmatpush1.msra.mxu0 0.0
  %384 = vmatprep.subr.mxu0 0.0
  %385 = vmatpush1.msra.mxu0 0.0
  %386 = vmatprep.subr.mxu0 0.0
  %387 = vmatpush1.msra.mxu0 0.0
  %388 = vmatprep.subr.mxu0 0.0
  %389 = vmatpush1.msra.mxu0 0.0
  %390 = vmatprep.subr.mxu0 0.0
  %391 = vmatpush1.msra.mxu0 0.0
  %392 = vmatprep.subr.mxu0 0.0
  %393 = vmatpush1.msra.mxu0 0.0
  %394 = vmatprep.subr.mxu0 0.0
  %395 = vmatpush1.msra.mxu0 0.0
  %396 = vmatprep.subr.mxu0 0.0
  %397 = vmatpush1.msra.mxu0 0.0
  %398 = vmatprep.subr.mxu0 0.0
  %399 = vmatpush1.msra.mxu0 0.0
  %400 = vmatprep.subr.mxu0 0.0
  %401 = vmatpush1.msra.mxu0 0.0
  %402 = vmatprep.subr.mxu0 0.0
  %403 = vmatpush1.msra.mxu0 0.0
  %404 = vmatprep.subr.mxu0 0.0
  %405 = vmatpush1.msra.mxu0 0.0
  %406 = vmatprep.subr.mxu0 0.0
  %407 = vmatpush1.msra.mxu0 0.0
  %408 = vmatprep.subr.mxu0 0.0
  %409 = vmatpush1.msra.mxu0 0.0
  %410 = vmatprep.subr.mxu0 0.0
  %411 = vmatpush1.msra.mxu0 0.0
  %412 = vmatprep.subr.mxu0 0.0
  %413 = vmatpush1.msra.mxu0 0.0
  %414 = vmatprep.mubr.f32.mxu0 0.0
  %415 = vmatmul.mubr.f32.gmra.mrb[0].mxu0 %v345
  %v416 = vpop.f32.mrb[0].mxu0
  %v417 = vadd.f32 0.0, %v416
  %v418 = vpop.f32.mrb[0].mxu0
  %419 = vdwg.mxu0
  %v420 = vadd.f32 %v349, %v417
  %421 = vadd.xlane.f32.xlu0 %v420
  %v422 = vpop.xlane.xlu0 %421
  %v423 = vmul.f32 %v422, 0.03125
  %v424 = vsub.f32 %v420, %v423
  %v425 = vmul.f32 %v424, %v66
  %v426 = vmul.f32 %v425, %v425
  %427 = vadd.xlane.f32.xlu0 %v426
  %v428 = vpop.xlane.xlu0 %427
  %v429 = vmul.f32 %v428, 0.03125
  %v430 = vadd.f32 %v429, 1e-05
  %v431 = vrsqrt.pop %v430
  %v432 = vmul.f32 %v424, %v431
  %v433 = vmul.f32 %v432, %v53
  %v434 = vadd.f32 %v433, %v60
  %v435 = vmul.f32 %v434, 0.5
  %v436 = vmul.f32 %v434, 0.70710677
  %v437 = verf.f32.pop %v436
  %v438 = vadd.f32 %v437, 1.0
  %v439 = vmul.f32 %v435, %v438
  %s440 = scalar_lea.vmem %s5, 24
  %441 = vst [vmem:[%s440] sm:$0xff] %v439
  %s442 = scalar_lea.vmem %s0, 32
  %v443 = vld [vmem:[%s442] sm:$0xff]
  %444 = vmatprep.subr.mxu0 0.0
  %445 = vmatpush1.msra.mxu0 %v32
  %446 = vmatprep.subr.mxu0 0.0
  %447 = vmatpush1.msra.mxu0 %v33
  %448 = vmatprep.subr.mxu0 0.0
  %449 = vmatpush1.msra.mxu0 %v34
  %450 = vmatprep.subr.mxu0 0.0
  %451 = vmatpush1.msra.mxu0 %v35
  %452 = vmatprep.subr.mxu0 0.0
  %453 = vmatpush1.msra.mxu0 %v36
  %454 = vmatprep.subr.mxu0 0.0
  %455 = vmatpush1.msra.mxu0 %v37
  %456 = vmatprep.subr.mxu0 0.0
  %457 = vmatpush1.msra.mxu0 %v38
  %458 = vmatprep.subr.mxu0 0.0
  %459 = vmatpush1.msra.mxu0 %v39
  %460 = vmatprep.subr.mxu0 0.0
  %461 = vmatpush1.msra.mxu0 %v40
  %462 = vmatprep.subr.mxu0 0.0
  %463 = vmatpush1.msra.mxu0 %v41
  %464 = vmatprep.subr.mxu0 0.0
  %465 = vmatpush1.msra.mxu0 %v42
  %466 = vmatprep.subr.mxu0 0.0
  %467 = vmatpush1.msra.mxu0 %v43
  %468 = vmatprep.subr.mxu0 0.0
  %469 = vmatpush1.msra.mxu0 %v44
  %470 = vmatprep.subr.mxu0 0.0
  %471 = vmatpush1.msra.mxu0 %v45
  %472 = vmatprep.subr.mxu0 0.0
  %473 = vmatpush1.msra.mxu0 %v46
  %474 = vmatprep.subr.mxu0 0.0
  %475 = vmatpush1.msra.mxu0 %v47
  %476 = vmatprep.subr.mxu0 0.0
  %477 = vmatpush1.msra.mxu0 0.0
  %478 = vmatprep.subr.mxu0 0.0
  %479 = vmatpush1.msra.mxu0 0.0
  %480 = vmatprep.subr.mxu0 0.0
  %481 = vmatpush1.msra.mxu0 0.0
  %482 = vmatprep.subr.mxu0 0.0
  %483 = vmatpush1.msra.mxu0 0.0
  %484 = vmatprep.subr.mxu0 0.0
  %485 = vmatpush1.msra.mxu0 0.0
  %486 = vmatprep.subr.mxu0 0.0
  %487 = vmatpush1.msra.mxu0 0.0
  %488 = vmatprep.subr.mxu0 0.0
  %489 = vmatpush1.msra.mxu0 0.0
  %490 = vmatprep.subr.mxu0 0.0
  %491 = vmatpush1.msra.mxu0 0.0
  %492 = vmatprep.subr.mxu0 0.0
  %493 = vmatpush1.msra.mxu0 0.0
  %494 = vmatprep.subr.mxu0 0.0
  %495 = vmatpush1.msra.mxu0 0.0
  %496 = vmatprep.subr.mxu0 0.0
  %497 = vmatpush1.msra.mxu0 0.0
  %498 = vmatprep.subr.mxu0 0.0
  %499 = vmatpush1.msra.mxu0 0.0
  %500 = vmatprep.subr.mxu0 0.0
  %501 = vmatpush1.msra.mxu0 0.0
  %502 = vmatprep.subr.mxu0 0.0
  %503 = vmatpush1.msra.mxu0 0.0
  %504 = vmatprep.subr.mxu0 0.0
  %505 = vmatpush1.msra.mxu0 0.0
  %506 = vmatprep.subr.mxu0 0.0
  %507 = vmatpush1.msra.mxu0 0.0
  %508 = vmatprep.mubr.f32.mxu0 0.0
  %509 = vmatmul.mubr.f32.gmra.mrb[0].mxu0 %v439
  %v510 = vpop.f32.mrb[0].mxu0
  %v511 = vadd.f32 0.0, %v510
  %v512 = vpop.f32.mrb[0].mxu0
  %513 = vdwg.mxu0
  %v514 = vadd.f32 %v443, %v511
  %515 = vadd.xlane.f32.xlu0 %v514
  %v516 = vpop.xlane.xlu0 %515
  %v517 = vmul.f32 %v516, 0.03125
  %v518 = vsub.f32 %v514, %v517
  %v519 = vmul.f32 %v518, %v66
  %v520 = vmul.f32 %v519, %v519
  %521 = vadd.xlane.f32.xlu0 %v520
  %v522 = vpop.xlane.xlu0 %521
  %v523 = vmul.f32 %v522, 0.03125
  %v524 = vadd.f32 %v523, 1e-05
  %v525 = vrsqrt.pop %v524
  %v526 = vmul.f32 %v518, %v525
  %v527 = vmul.f32 %v526, %v53
  %v528 = vadd.f32 %v527, %v60
  %v529 = vmul.f32 %v528, 0.5
  %v530 = vmul.f32 %v528, 0.70710677
  %v531 = verf.f32.pop %v530
  %v532 = vadd.f32 %v531, 1.0
  %v533 = vmul.f32 %v529, %v532
  %s534 = scalar_lea.vmem %s5, 32
  %535 = vst [vmem:[%s534] sm:$0xff] %v533
  %s536 = scalar_lea.vmem %s0, 40
  %v537 = vld [vmem:[%s536] sm:$0xff]
  %538 = vmatprep.subr.mxu0 0.0
  %539 = vmatpush1.msra.mxu0 %v32
  %540 = vmatprep.subr.mxu0 0.0
  %541 = vmatpush1.msra.mxu0 %v33
  %542 = vmatprep.subr.mxu0 0.0
  %543 = vmatpush1.msra.mxu0 %v34
  %544 = vmatprep.subr.mxu0 0.0
  %545 = vmatpush1.msra.mxu0 %v35
  %546 = vmatprep.subr.mxu0 0.0
  %547 = vmatpush1.msra.mxu0 %v36
  %548 = vmatprep.subr.mxu0 0.0
  %549 = vmatpush1.msra.mxu0 %v37
  %550 = vmatprep.subr.mxu0 0.0
  %551 = vmatpush1.msra.mxu0 %v38
  %552 = vmatprep.subr.mxu0 0.0
  %553 = vmatpush1.msra.mxu0 %v39
  %554 = vmatprep.subr.mxu0 0.0
  %555 = vmatpush1.msra.mxu0 %v40
  %556 = vmatprep.subr.mxu0 0.0
  %557 = vmatpush1.msra.mxu0 %v41
  %558 = vmatprep.subr.mxu0 0.0
  %559 = vmatpush1.msra.mxu0 %v42
  %560 = vmatprep.subr.mxu0 0.0
  %561 = vmatpush1.msra.mxu0 %v43
  %562 = vmatprep.subr.mxu0 0.0
  %563 = vmatpush1.msra.mxu0 %v44
  %564 = vmatprep.subr.mxu0 0.0
  %565 = vmatpush1.msra.mxu0 %v45
  %566 = vmatprep.subr.mxu0 0.0
  %567 = vmatpush1.msra.mxu0 %v46
  %568 = vmatprep.subr.mxu0 0.0
  %569 = vmatpush1.msra.mxu0 %v47
  %570 = vmatprep.subr.mxu0 0.0
  %571 = vmatpush1.msra.mxu0 0.0
  %572 = vmatprep.subr.mxu0 0.0
  %573 = vmatpush1.msra.mxu0 0.0
  %574 = vmatprep.subr.mxu0 0.0
  %575 = vmatpush1.msra.mxu0 0.0
  %576 = vmatprep.subr.mxu0 0.0
  %577 = vmatpush1.msra.mxu0 0.0
  %578 = vmatprep.subr.mxu0 0.0
  %579 = vmatpush1.msra.mxu0 0.0
  %580 = vmatprep.subr.mxu0 0.0
  %581 = vmatpush1.msra.mxu0 0.0
  %582 = vmatprep.subr.mxu0 0.0
  %583 = vmatpush1.msra.mxu0 0.0
  %584 = vmatprep.subr.mxu0 0.0
  %585 = vmatpush1.msra.mxu0 0.0
  %586 = vmatprep.subr.mxu0 0.0
  %587 = vmatpush1.msra.mxu0 0.0
  %588 = vmatprep.subr.mxu0 0.0
  %589 = vmatpush1.msra.mxu0 0.0
  %590 = vmatprep.subr.mxu0 0.0
  %591 = vmatpush1.msra.mxu0 0.0
  %592 = vmatprep.subr.mxu0 0.0
  %593 = vmatpush1.msra.mxu0 0.0
  %594 = vmatprep.subr.mxu0 0.0
  %595 = vmatpush1.msra.mxu0 0.0
  %596 = vmatprep.subr.mxu0 0.0
  %597 = vmatpush1.msra.mxu0 0.0
  %598 = vmatprep.subr.mxu0 0.0
  %599 = vmatpush1.msra.mxu0 0.0
  %600 = vmatprep.subr.mxu0 0.0
  %601 = vmatpush1.msra.mxu0 0.0
  %602 = vmatprep.mubr.f32.mxu0 0.0
  %603 = vmatmul.mubr.f32.gmra.mrb[0].mxu0 %v533
  %v604 = vpop.f32.mrb[0].mxu0
  %v605 = vadd.f32 0.0, %v604
  %v606 = vpop.f32.mrb[0].mxu0
  %607 = vdwg.mxu0
  %v608 = vadd.f32 %v537, %v605
  %609 = vadd.xlane.f32.xlu0 %v608
  %v610 = vpop.xlane.xlu0 %609
  %v611 = vmul.f32 %v610, 0.03125
  %v612 = vsub.f32 %v608, %v611
  %v613 = vmul.f32 %v612, %v66
  %v614 = vmul.f32 %v613, %v613
  %615 = vadd.xlane.f32.xlu0 %v614
  %v616 = vpop.xlane.xlu0 %615
  %v617 = vmul.f32 %v616, 0.03125
  %v618 = vadd.f32 %v617, 1e-05
  %v619 = vrsqrt.pop %v618
  %v620 = vmul.f32 %v612, %v619
  %v621 = vmul.f32 %v620, %v53
  %v622 = vadd.f32 %v621, %v60
  %v623 = vmul.f32 %v622, 0.5
  %v624 = vmul.f32 %v622, 0.70710677
  %v625 = verf.f32.pop %v624
  %v626 = vadd.f32 %v625, 1.0
  %v627 = vmul.f32 %v623, %v626
  %s628 = scalar_lea.vmem %s5, 40
  %629 = vst [vmem:[%s628] sm:$0xff] %v627
  %s630 = scalar_lea.vmem %s0, 48
  %v631 = vld [vmem:[%s630] sm:$0xff]
  %632 = vmatprep.subr.mxu0 0.0
  %633 = vmatpush1.msra.mxu0 %v32
  %634 = vmatprep.subr.mxu0 0.0
  %635 = vmatpush1.msra.mxu0 %v33
  %636 = vmatprep.subr.mxu0 0.0
  %637 = vmatpush1.msra.mxu0 %v34
  %638 = vmatprep.subr.mxu0 0.0
  %639 = vmatpush1.msra.mxu0 %v35
  %640 = vmatprep.subr.mxu0 0.0
  %641 = vmatpush1.msra.mxu0 %v36
  %642 = vmatprep.subr.mxu0 0.0
  %643 = vmatpush1.msra.mxu0 %v37
  %644 = vmatprep.subr.mxu0 0.0
  %645 = vmatpush1.msra.mxu0 %v38
  %646 = vmatprep.subr.mxu0 0.0
  %647 = vmatpush1.msra.mxu0 %v39
  %648 = vmatprep.subr.mxu0 0.0
  %649 = vmatpush1.msra.mxu0 %v40
  %650 = vmatprep.subr.mxu0 0.0
  %651 = vmatpush1.msra.mxu0 %v41
  %652 = vmatprep.subr.mxu0 0.0
  %653 = vmatpush1.msra.mxu0 %v42
  %654 = vmatprep.subr.mxu0 0.0
  %655 = vmatpush1.msra.mxu0 %v43
  %656 = vmatprep.subr.mxu0 0.0
  %657 = vmatpush1.msra.mxu0 %v44
  %658 = vmatprep.subr.mxu0 0.0
  %659 = vmatpush1.msra.mxu0 %v45
  %660 = vmatprep.subr.mxu0 0.0
  %661 = vmatpush1.msra.mxu0 %v46
  %662 = vmatprep.subr.mxu0 0.0
  %663 = vmatpush1.msra.mxu0 %v47
  %664 = vmatprep.subr.mxu0 0.0
  %665 = vmatpush1.msra.mxu0 0.0
  %666 = vmatprep.subr.mxu0 0.0
  %667 = vmatpush1.msra.mxu0 0.0
  %668 = vmatprep.subr.mxu0 0.0
  %669 = vmatpush1.msra.mxu0 0.0
  %670 = vmatprep.subr.mxu0 0.0
  %671 = vmatpush1.msra.mxu0 0.0
  %672 = vmatprep.subr.mxu0 0.0
  %673 = vmatpush1.msra.mxu0 0.0
  %674 = vmatprep.subr.mxu0 0.0
  %675 = vmatpush1.msra.mxu0 0.0
  %676 = vmatprep.subr.mxu0 0.0
  %677 = vmatpush1.msra.mxu0 0.0
  %678 = vmatprep.subr.mxu0 0.0
  %679 = vmatpush1.msra.mxu0 0.0
  %680 = vmatprep.subr.mxu0 0.0
  %681 = vmatpush1.msra.mxu0 0.0
  %682 = vmatprep.subr.mxu0 0.0
  %683 = vmatpush1.msra.mxu0 0.0
  %684 = vmatprep.subr.mxu0 0.0
  %685 = vmatpush1.msra.mxu0 0.0
  %686 = vmatprep.subr.mxu0 0.0
  %687 = vmatpush1.msra.mxu0 0.0
  %688 = vmatprep.subr.mxu0 0.0
  %689 = vmatpush1.msra.mxu0 0.0
  %690 = vmatprep.subr.mxu0 0.0
  %691 = vmatpush1.msra.mxu0 0.0
  %692 = vmatprep.subr.mxu0 0.0
  %693 = vmatpush1.msra.mxu0 0.0
  %694 = vmatprep.subr.mxu0 0.0
  %695 = vmatpush1.msra.mxu0 0.0
  %696 = vmatprep.mubr.f32.mxu0 0.0
  %697 = vmatmul.mubr.f32.gmra.mrb[0].mxu0 %v627
  %v698 = vpop.f32.mrb[0].mxu0
  %v699 = vadd.f32 0.0, %v698
  %v700 = vpop.f32.mrb[0].mxu0
  %701 = vdwg.mxu0
  %v702 = vadd.f32 %v631, %v699
  %703 = vadd.xlane.f32.xlu0 %v702
  %v704 = vpop.xlane.xlu0 %703
  %v705 = vmul.f32 %v704, 0.03125
  %v706 = vsub.f32 %v702, %v705
  %v707 = vmul.f32 %v706, %v66
  %v708 = vmul.f32 %v707, %v707
  %709 = vadd.xlane.f32.xlu0 %v708
  %v710 = vpop.xlane.xlu0 %709
  %v711 = vmul.f32 %v710, 0.03125
  %v712 = vadd.f32 %v711, 1e-05
  %v713 = vrsqrt.pop %v712
  %v714 = vmul.f32 %v706, %v713
  %v715 = vmul.f32 %v714, %v53
  %v716 = vadd.f32 %v715, %v60
  %v717 = vmul.f32 %v716, 0.5
  %v718 = vmul.f32 %v716, 0.70710677
  %v719 = verf.f32.pop %v718
  %v720 = vadd.f32 %v719, 1.0
  %v721 = vmul.f32 %v717, %v720
  %s722 = scalar_lea.vmem %s5, 48
  %723 = vst [vmem:[%s722] sm:$0xff] %v721
  %s724 = scalar_lea.vmem %s0, 56
  %v725 = vld [vmem:[%s724] sm:$0xff]
  %726 = vmatprep.subr.mxu0 0.0
  %727 = vmatpush1.msra.mxu0 %v32
  %728 = vmatprep.subr.mxu0 0.0
  %729 = vmatpush1.msra.mxu0 %v33
  %730 = vmatprep.subr.mxu0 0.0
  %731 = vmatpush1.msra.mxu0 %v34
  %732 = vmatprep.subr.mxu0 0.0
  %733 = vmatpush1.msra.mxu0 %v35
  %734 = vmatprep.subr.mxu0 0.0
  %735 = vmatpush1.msra.mxu0 %v36
  %736 = vmatprep.subr.mxu0 0.0
  %737 = vmatpush1.msra.mxu0 %v37
  %738 = vmatprep.subr.mxu0 0.0
  %739 = vmatpush1.msra.mxu0 %v38
  %740 = vmatprep.subr.mxu0 0.0
  %741 = vmatpush1.msra.mxu0 %v39
  %742 = vmatprep.subr.mxu0 0.0
  %743 = vmatpush1.msra.mxu0 %v40
  %744 = vmatprep.subr.mxu0 0.0
  %745 = vmatpush1.msra.mxu0 %v41
  %746 = vmatprep.subr.mxu0 0.0
  %747 = vmatpush1.msra.mxu0 %v42
  %748 = vmatprep.subr.mxu0 0.0
  %749 = vmatpush1.msra.mxu0 %v43
  %750 = vmatprep.subr.mxu0 0.0
  %751 = vmatpush1.msra.mxu0 %v44
  %752 = vmatprep.subr.mxu0 0.0
  %753 = vmatpush1.msra.mxu0 %v45
  %754 = vmatprep.subr.mxu0 0.0
  %755 = vmatpush1.msra.mxu0 %v46
  %756 = vmatprep.subr.mxu0 0.0
  %757 = vmatpush1.msra.mxu0 %v47
  %758 = vmatprep.subr.mxu0 0.0
  %759 = vmatpush1.msra.mxu0 0.0
  %760 = vmatprep.subr.mxu0 0.0
  %761 = vmatpush1.msra.mxu0 0.0
  %762 = vmatprep.subr.mxu0 0.0
  %763 = vmatpush1.msra.mxu0 0.0
  %764 = vmatprep.subr.mxu0 0.0
  %765 = vmatpush1.msra.mxu0 0.0
  %766 = vmatprep.subr.mxu0 0.0
  %767 = vmatpush1.msra.mxu0 0.0
  %768 = vmatprep.subr.mxu0 0.0
  %769 = vmatpush1.msra.mxu0 0.0
  %770 = vmatprep.subr.mxu0 0.0
  %771 = vmatpush1.msra.mxu0 0.0
  %772 = vmatprep.subr.mxu0 0.0
  %773 = vmatpush1.msra.mxu0 0.0
  %774 = vmatprep.subr.mxu0 0.0
  %775 = vmatpush1.msra.mxu0 0.0
  %776 = vmatprep.subr.mxu0 0.0
  %777 = vmatpush1.msra.mxu0 0.0
  %778 = vmatprep.subr.mxu0 0.0
  %779 = vmatpush1.msra.mxu0 0.0
  %780 = vmatprep.subr.mxu0 0.0
  %781 = vmatpush1.msra.mxu0 0.0
  %782 = vmatprep.subr.mxu0 0.0
  %783 = vmatpush1.msra.mxu0 0.0
  %784 = vmatprep.subr.mxu0 0.0
  %785 = vmatpush1.msra.mxu0 0.0
  %786 = vmatprep.subr.mxu0 0.0
  %787 = vmatpush1.msra.mxu0 0.0
  %788 = vmatprep.subr.mxu0 0.0
  %789 = vmatpush1.msra.mxu0 0.0
  %790 = vmatprep.mubr.f32.mxu0 0.0
  %791 = vmatmul.mubr.f32.gmra.mrb[0].mxu0 %v721
  %v792 = vpop.f32.mrb[0].mxu0
  %v793 = vadd.f32 0.0, %v792
  %v794 = vpop.f32.mrb[0].mxu0
  %795 = vdwg.mxu0
  %v796 = vadd.f32 %v725, %v793
  %797 = vadd.xlane.f32.xlu0 %v796
  %v798 = vpop.xlane.xlu0 %797
  %v799 = vmul.f32 %v798, 0.03125
  %v800 = vsub.f32 %v796, %v799
  %v801 = vmul.f32 %v800, %v66
  %v802 = vmul.f32 %v801, %v801
  %803 = vadd.xlane.f32.xlu0 %v802
  %v804 = vpop.xlane.xlu0 %803
  %v805 = vmul.f32 %v804, 0.03125
  %v806 = vadd.f32 %v805, 1e-05
  %v807 = vrsqrt.pop %v806
  %v808 = vmul.f32 %v800, %v807
  %v809 = vmul.f32 %v808, %v53
  %v810 = vadd.f32 %v809, %v60
  %v811 = vmul.f32 %v810, 0.5
  %v812 = vmul.f32 %v810, 0.70710677
  %v813 = verf.f32.pop %v812
  %v814 = vadd.f32 %v813, 1.0
  %v815 = vmul.f32 %v811, %v814
  %s816 = scalar_lea.vmem %s5, 56
  %817 = vst [vmem:[%s816] sm:$0xff] %v815
  %818 = vst [vmem:[#allocation2] sm:$0xff] %v815
  // Predicated region
  $region26: #{rnn_layer_forward.1} parent=0 // pred_check
    _
  $region27: #{rnn_layer_forward.1} parent=0 // pred_check_branch
    %820 = sbr.rel (0) target = $region29
  $region28: #{rnn_layer_forward.1} parent=0 // pred_region
    _
  $region29: #{rnn_layer_forward.1} parent=0 // pred_fallthru
    _
  // Predicated region
  $region30: #{rnn_layer_forward.1} parent=0 // pred_check
    _
  $region31: #{rnn_layer_forward.1} parent=0 // pred_check_branch
    %822 = sbr.rel (0) target = $region33
  $region32: #{rnn_layer_forward.1} parent=0 // pred_region
    _
  $region33: #{rnn_layer_forward.1} parent=0 // pred_fallthru
    _

</llo_original>
